<compile_context>
chip_gen: v7x
topology: tpu7x:2x2x1
jax: 0.10.0
libtpu: 0.0.40
codegen_flags: <defaults>
</compile_context>

<pallas_src>
import jax
import jax.numpy as jnp
from jax import lax
from jax.experimental import pallas as pl
from jax.experimental.pallas import tpu as pltpu  # noqa: F401  (TPU backend, whole-array VMEM residency)


# --------------------------------------------------------------------------------------
# Fused TextRNN kernel: embedding (one-hot fold) + LSTM recurrence + FC.
# Gate order on the packed 4H axis is PyTorch's [i, f, g, o].
# --------------------------------------------------------------------------------------
def textrnn_kernel(ids_ref, emb_ref, wih_ref, whh_ref, b_ref, h0_ref, c0_ref,
                   wfc_ref, bfc_ref,
                   logits_ref, ht_ref, ct_ref):
    T, B, _ = ids_ref.shape
    H = h0_ref.shape[-1]
    V = emb_ref.shape[0]

    # Hoist resident weights out of the loop (loaded once into vregs).
    emb = emb_ref[...]       # (V, E)
    w_ih = wih_ref[...]      # (E, 4H)
    w_hh = whh_ref[...]      # (H, 4H)
    b = b_ref[...]           # (1, 4H) = b_ih + b_hh
    w_fc = wfc_ref[...]      # (H, V)
    b_fc = bfc_ref[...]      # (1, V)

    # Fold the embedding gather into the input projection: one MXU push, done once.
    # onehot(v) @ (emb @ W_ih)  ==  emb[v] @ W_ih   (one-hot row selection is exact).
    emb_wih = jnp.dot(emb, w_ih, preferred_element_type=jnp.float32)   # (V, 4H)

    vocab_iota = lax.broadcasted_iota(jnp.int32, (B, V), 1)            # (B, V)

    def step(t, carry):
        h, c = carry                          # (B, H) each, vreg-carried
        ids_t = ids_ref[t]                    # (B, 1) int32
        onehot = jnp.where(vocab_iota == ids_t, 1.0, 0.0)              # (B, V) f32
        # Two lane-dense MXU pushes per step for the gates (4H = 128 lanes).
        gates = (jnp.dot(onehot, emb_wih, preferred_element_type=jnp.float32)
                 + jnp.dot(h, w_hh, preferred_element_type=jnp.float32)
                 + b)                         # (B, 4H)
        i_g = jax.nn.sigmoid(gates[:, 0 * H:1 * H])
        f_g = jax.nn.sigmoid(gates[:, 1 * H:2 * H])
        g_g = jnp.tanh(gates[:, 2 * H:3 * H])
        o_g = jax.nn.sigmoid(gates[:, 3 * H:4 * H])
        c_new = f_g * c + i_g * g_g
        h_new = o_g * jnp.tanh(c_new)
        # nn.Dropout(0.2) is identity in eval mode; FC fused right here.
        # TODO(synk): training-mode dropout (stochastic mask) not implemented.
        logits_ref[t] = (jnp.dot(h_new, w_fc, preferred_element_type=jnp.float32)
                         + b_fc)              # (B, V)
        return (h_new, c_new)

    hT, cT = lax.fori_loop(0, T, step, (h0_ref[0], c0_ref[0]), unroll=True)
    ht_ref[0] = hT                            # written once, after the loop
    ct_ref[0] = cT


def textrnn_fused_call(x_idx, emb, w_ih, w_hh, b_lstm, h0, c0, w_fc, b_fc):
    T, B, _ = x_idx.shape
    H = w_hh.shape[0]
    V = w_fc.shape[-1]
    out_shapes = (
        jax.ShapeDtypeStruct((T, B, V), jnp.float32),   # logits
        jax.ShapeDtypeStruct((1, B, H), jnp.float32),   # h_T
        jax.ShapeDtypeStruct((1, B, H), jnp.float32),   # c_T
    )
    # No grid: every operand is tiny and fully resident in VMEM (whole-array blocks,
    # one DMA each).  The entire forward pass is this single pallas_call.
    return pl.pallas_call(
        textrnn_kernel,
        out_shape=out_shapes,
    )(x_idx, emb, w_ih, w_hh, b_lstm, h0, c0, w_fc, b_fc.reshape(1, V))


# --------------------------------------------------------------------------------------
# Full forward (mirrors TextRNN.forward).  n_layers=1 (module default).
# --------------------------------------------------------------------------------------
def textrnn_forward(params, x_idx, hidden):
    h0, c0 = hidden
    logits, hT, cT = textrnn_fused_call(
        x_idx.astype(jnp.int32), params["embedding"],
        params["w_ih"], params["w_hh"], params["b_lstm"],
        h0, c0, params["w_fc"], params["b_fc"])
    return logits, (hT, cT)


# Pure-JAX reference (no Pallas) used only for a correctness check in __main__.
def textrnn_reference(params, x_idx, hidden):
    hp = lax.Precision.HIGHEST
    h, c = hidden[0][0], hidden[1][0]
    emb = params["embedding"][x_idx[..., 0]]            # (T, B, E)
    H = h.shape[-1]
    outs = []
    for t in range(emb.shape[0]):
        gates = (jnp.dot(emb[t], params["w_ih"], precision=hp)
                 + jnp.dot(h, params["w_hh"], precision=hp)
                 + params["b_lstm"])
        i_g = jax.nn.sigmoid(gates[:, 0 * H:1 * H])
        f_g = jax.nn.sigmoid(gates[:, 1 * H:2 * H])
        g_g = jnp.tanh(gates[:, 2 * H:3 * H])
        o_g = jax.nn.sigmoid(gates[:, 3 * H:4 * H])
        c = f_g * c + i_g * g_g
        h = o_g * jnp.tanh(c)
        outs.append(jnp.dot(h, params["w_fc"], precision=hp) + params["b_fc"])
    return jnp.stack(outs), (h[None], c[None])


def init_params(key, input_size, hidden_size, embedding_size):
    ks = jax.random.split(key, 6)
    scale = 0.1
    return {
        "embedding": scale * jax.random.normal(
            ks[0], (input_size, embedding_size), jnp.float32),
        # Packed gate weights, order [i, f, g, o] along the 4H axis, stored for x @ W.
        "w_ih": scale * jax.random.normal(
            ks[1], (embedding_size, 4 * hidden_size), jnp.float32),
        "w_hh": scale * jax.random.normal(
            ks[2], (hidden_size, 4 * hidden_size), jnp.float32),
        # Combined b_ih + b_hh.
        "b_lstm": scale * jax.random.normal(
            ks[3], (1, 4 * hidden_size), jnp.float32),
        "w_fc": scale * jax.random.normal(
            ks[4], (hidden_size, input_size), jnp.float32),
        "b_fc": scale * jax.random.normal(
            ks[5], (input_size,), jnp.float32),
    }


if __name__ == "__main__":
    input_size = 32      # vocab (V)
    hidden_size = 32     # H  -> 4H = 128 lanes
    embedding_size = 16  # E
    n_layers = 1
    T, B = 8, 2

    key = jax.random.PRNGKey(0)
    k_param, k_x = jax.random.split(key)
    params = init_params(k_param, input_size, hidden_size, embedding_size)

    x = jax.random.randint(k_x, (T, B, 1), 0, input_size, dtype=jnp.int32)
    h0 = jnp.zeros((n_layers, B, hidden_size), jnp.float32)
    c0 = jnp.zeros((n_layers, B, hidden_size), jnp.float32)

    logits, (hT, cT) = textrnn_forward(params, x, (h0, c0))
    jax.block_until_ready((logits, hT, cT))

    assert logits.shape == (T, B, input_size)
    assert hT.shape == (n_layers, B, hidden_size)
    assert cT.shape == (n_layers, B, hidden_size)

    # Correctness check against a pure-JAX reference of the same forward pass.
    ref_logits, (ref_h, ref_c) = textrnn_reference(params, x, (h0, c0))
    assert jnp.allclose(logits, ref_logits, atol=2e-3, rtol=2e-3)
    assert jnp.allclose(hT, ref_h, atol=2e-3, rtol=2e-3)
    assert jnp.allclose(cT, ref_c, atol=2e-3, rtol=2e-3)

    print("KERNEL_OK")
</pallas_src>

<mosaic_0001>
module attributes {stable_mosaic.version = 11 : i64} {
  func.func @textrnn_kernel(%arg0: memref<8x2x1xi32, #tpu.memory_space<vmem>>, %arg1: memref<32x16xf32, #tpu.memory_space<vmem>>, %arg2: memref<16x128xf32, #tpu.memory_space<vmem>>, %arg3: memref<32x128xf32, #tpu.memory_space<vmem>>, %arg4: memref<1x128xf32, #tpu.memory_space<vmem>>, %arg5: memref<1x2x32xf32, #tpu.memory_space<vmem>>, %arg6: memref<1x2x32xf32, #tpu.memory_space<vmem>>, %arg7: memref<32x32xf32, #tpu.memory_space<vmem>>, %arg8: memref<1x32xf32, #tpu.memory_space<vmem>>, %arg9: memref<8x2x32xf32, #tpu.memory_space<vmem>>, %arg10: memref<1x2x32xf32, #tpu.memory_space<vmem>>, %arg11: memref<1x2x32xf32, #tpu.memory_space<vmem>>) attributes {dimension_semantics = [], scalar_prefetch = 0 : i64, scratch_operands = 0 : i64, tpu.core_type = #tpu.core_type<tc>} {
    %c0 = arith.constant 0 : index
    %c0_0 = arith.constant 0 : index
    %0 = vector.load %arg1[%c0, %c0_0] : memref<32x16xf32, #tpu.memory_space<vmem>>, vector<32x16xf32>
    %c0_1 = arith.constant 0 : index
    %c0_2 = arith.constant 0 : index
    %1 = vector.load %arg2[%c0_1, %c0_2] : memref<16x128xf32, #tpu.memory_space<vmem>>, vector<16x128xf32>
    %c0_3 = arith.constant 0 : index
    %c0_4 = arith.constant 0 : index
    %2 = vector.load %arg3[%c0_3, %c0_4] : memref<32x128xf32, #tpu.memory_space<vmem>>, vector<32x128xf32>
    %c0_5 = arith.constant 0 : index
    %c0_6 = arith.constant 0 : index
    %3 = vector.load %arg4[%c0_5, %c0_6] : memref<1x128xf32, #tpu.memory_space<vmem>>, vector<1x128xf32>
    %c0_7 = arith.constant 0 : index
    %c0_8 = arith.constant 0 : index
    %4 = vector.load %arg7[%c0_7, %c0_8] : memref<32x32xf32, #tpu.memory_space<vmem>>, vector<32x32xf32>
    %c0_9 = arith.constant 0 : index
    %c0_10 = arith.constant 0 : index
    %5 = vector.load %arg8[%c0_9, %c0_10] : memref<1x32xf32, #tpu.memory_space<vmem>>, vector<1x32xf32>
    %cst = arith.constant dense<0.000000e+00> : vector<32x128xf32>
    %6 = tpu.matmul %0, %1, %cst {dimension_numbers = #tpu.dot_dimension_numbers<[1], [0], [0], [1], [0, 0, 1, 1], [], []>} : vector<32x16xf32>, vector<16x128xf32>, vector<32x128xf32> -> vector<32x128xf32>
    %7 = tpu.iota {dimensions = array<i32: 1>} : vector<2x32xi32>
    %c0_11 = arith.constant 0 : index
    %c0_12 = arith.constant 0 : index
    %c0_13 = arith.constant 0 : index
    %8 = vector.load %arg5[%c0_11, %c0_12, %c0_13] : memref<1x2x32xf32, #tpu.memory_space<vmem>>, vector<1x2x32xf32>
    %9 = vector.shape_cast %8 : vector<1x2x32xf32> to vector<2x32xf32>
    %c0_14 = arith.constant 0 : index
    %c0_15 = arith.constant 0 : index
    %c0_16 = arith.constant 0 : index
    %10 = vector.load %arg6[%c0_14, %c0_15, %c0_16] : memref<1x2x32xf32, #tpu.memory_space<vmem>>, vector<1x2x32xf32>
    %11 = vector.shape_cast %10 : vector<1x2x32xf32> to vector<2x32xf32>
    %c0_i32 = arith.constant 0 : i32
    %12 = arith.index_cast %c0_i32 : i32 to index
    %c0_17 = arith.constant 0 : index
    %c0_18 = arith.constant 0 : index
    %13 = vector.load %arg0[%12, %c0_17, %c0_18] : memref<8x2x1xi32, #tpu.memory_space<vmem>>, vector<1x2x1xi32>
    %14 = vector.shape_cast %13 : vector<1x2x1xi32> to vector<2x1xi32>
    %15 = vector.broadcast %14 : vector<2x1xi32> to vector<2x32xi32>
    %16 = arith.cmpi eq, %7, %15 : vector<2x32xi32>
    %cst_19 = arith.constant 1.000000e+00 : f32
    %cst_20 = arith.constant 0.000000e+00 : f32
    %17 = vector.broadcast %cst_19 : f32 to vector<2x32xf32>
    %18 = vector.broadcast %cst_20 : f32 to vector<2x32xf32>
    %19 = arith.select %16, %17, %18 : vector<2x32xi1>, vector<2x32xf32>
    %cst_21 = arith.constant dense<0.000000e+00> : vector<2x128xf32>
    %20 = tpu.matmul %19, %6, %cst_21 {dimension_numbers = #tpu.dot_dimension_numbers<[1], [0], [0], [1], [0, 0, 1, 1], [], []>} : vector<2x32xf32>, vector<32x128xf32>, vector<2x128xf32> -> vector<2x128xf32>
    %cst_22 = arith.constant dense<0.000000e+00> : vector<2x128xf32>
    %21 = tpu.matmul %9, %2, %cst_22 {dimension_numbers = #tpu.dot_dimension_numbers<[1], [0], [0], [1], [0, 0, 1, 1], [], []>} : vector<2x32xf32>, vector<32x128xf32>, vector<2x128xf32> -> vector<2x128xf32>
    %22 = arith.addf %20, %21 : vector<2x128xf32>
    %23 = vector.broadcast %3 : vector<1x128xf32> to vector<2x128xf32>
    %24 = arith.addf %22, %23 : vector<2x128xf32>
    %25 = vector.extract_strided_slice %24 {offsets = [0, 0], sizes = [2, 32], strides = [1, 1]} : vector<2x128xf32> to vector<2x32xf32>
    %26 = arith.negf %25 : vector<2x32xf32>
    %27 = math.exp %26 : vector<2x32xf32>
    %cst_23 = arith.constant 1.000000e+00 : f32
    %28 = vector.broadcast %cst_23 : f32 to vector<2x32xf32>
    %29 = arith.addf %28, %27 : vector<2x32xf32>
    %30 = arith.divf %28, %29 : vector<2x32xf32>
    %31 = vector.extract_strided_slice %24 {offsets = [0, 32], sizes = [2, 32], strides = [1, 1]} : vector<2x128xf32> to vector<2x32xf32>
    %32 = arith.negf %31 : vector<2x32xf32>
    %33 = math.exp %32 : vector<2x32xf32>
    %cst_24 = arith.constant 1.000000e+00 : f32
    %34 = vector.broadcast %cst_24 : f32 to vector<2x32xf32>
    %35 = arith.addf %34, %33 : vector<2x32xf32>
    %36 = arith.divf %34, %35 : vector<2x32xf32>
    %37 = vector.extract_strided_slice %24 {offsets = [0, 64], sizes = [2, 32], strides = [1, 1]} : vector<2x128xf32> to vector<2x32xf32>
    %38 = math.tanh %37 : vector<2x32xf32>
    %39 = vector.extract_strided_slice %24 {offsets = [0, 96], sizes = [2, 32], strides = [1, 1]} : vector<2x128xf32> to vector<2x32xf32>
    %40 = arith.negf %39 : vector<2x32xf32>
    %41 = math.exp %40 : vector<2x32xf32>
    %cst_25 = arith.constant 1.000000e+00 : f32
    %42 = vector.broadcast %cst_25 : f32 to vector<2x32xf32>
    %43 = arith.addf %42, %41 : vector<2x32xf32>
    %44 = arith.divf %42, %43 : vector<2x32xf32>
    %45 = arith.mulf %36, %11 : vector<2x32xf32>
    %46 = arith.mulf %30, %38 : vector<2x32xf32>
    %47 = arith.addf %45, %46 : vector<2x32xf32>
    %48 = math.tanh %47 : vector<2x32xf32>
    %49 = arith.mulf %44, %48 : vector<2x32xf32>
    %cst_26 = arith.constant dense<0.000000e+00> : vector<2x32xf32>
    %50 = tpu.matmul %49, %4, %cst_26 {dimension_numbers = #tpu.dot_dimension_numbers<[1], [0], [0], [1], [0, 0, 1, 1], [], []>} : vector<2x32xf32>, vector<32x32xf32>, vector<2x32xf32> -> vector<2x32xf32>
    %51 = vector.broadcast %5 : vector<1x32xf32> to vector<2x32xf32>
    %52 = arith.addf %50, %51 : vector<2x32xf32>
    %53 = arith.index_cast %c0_i32 : i32 to index
    %c0_27 = arith.constant 0 : index
    %c0_28 = arith.constant 0 : index
    %54 = vector.load %arg9[%53, %c0_27, %c0_28] : memref<8x2x32xf32, #tpu.memory_space<vmem>>, vector<1x2x32xf32>
    %55 = vector.shape_cast %54 : vector<1x2x32xf32> to vector<2x32xf32>
    %56 = vector.shape_cast %52 : vector<2x32xf32> to vector<1x2x32xf32>
    tpu.vector_store %arg9[%53, %c0_27, %c0_28], %56 {strides = array<i32>} : memref<8x2x32xf32, #tpu.memory_space<vmem>>, vector<1x2x32xf32>,
    %c1_i32 = arith.constant 1 : i32
    %57 = arith.index_cast %c1_i32 : i32 to index
    %c0_29 = arith.constant 0 : index
    %c0_30 = arith.constant 0 : index
    %58 = vector.load %arg0[%57, %c0_29, %c0_30] : memref<8x2x1xi32, #tpu.memory_space<vmem>>, vector<1x2x1xi32>
    %59 = vector.shape_cast %58 : vector<1x2x1xi32> to vector<2x1xi32>
    %60 = vector.broadcast %59 : vector<2x1xi32> to vector<2x32xi32>
    %61 = arith.cmpi eq, %7, %60 : vector<2x32xi32>
    %cst_31 = arith.constant 1.000000e+00 : f32
    %cst_32 = arith.constant 0.000000e+00 : f32
    %62 = vector.broadcast %cst_31 : f32 to vector<2x32xf32>
    %63 = vector.broadcast %cst_32 : f32 to vector<2x32xf32>
    %64 = arith.select %61, %62, %63 : vector<2x32xi1>, vector<2x32xf32>
    %cst_33 = arith.constant dense<0.000000e+00> : vector<2x128xf32>
    %65 = tpu.matmul %64, %6, %cst_33 {dimension_numbers = #tpu.dot_dimension_numbers<[1], [0], [0], [1], [0, 0, 1, 1], [], []>} : vector<2x32xf32>, vector<32x128xf32>, vector<2x128xf32> -> vector<2x128xf32>
    %cst_34 = arith.constant dense<0.000000e+00> : vector<2x128xf32>
    %66 = tpu.matmul %49, %2, %cst_34 {dimension_numbers = #tpu.dot_dimension_numbers<[1], [0], [0], [1], [0, 0, 1, 1], [], []>} : vector<2x32xf32>, vector<32x128xf32>, vector<2x128xf32> -> vector<2x128xf32>
    %67 = arith.addf %65, %66 : vector<2x128xf32>
    %68 = vector.broadcast %3 : vector<1x128xf32> to vector<2x128xf32>
    %69 = arith.addf %67, %68 : vector<2x128xf32>
    %70 = vector.extract_strided_slice %69 {offsets = [0, 0], sizes = [2, 32], strides = [1, 1]} : vector<2x128xf32> to vector<2x32xf32>
    %71 = arith.negf %70 : vector<2x32xf32>
    %72 = math.exp %71 : vector<2x32xf32>
    %cst_35 = arith.constant 1.000000e+00 : f32
    %73 = vector.broadcast %cst_35 : f32 to vector<2x32xf32>
    %74 = arith.addf %73, %72 : vector<2x32xf32>
    %75 = arith.divf %73, %74 : vector<2x32xf32>
    %76 = vector.extract_strided_slice %69 {offsets = [0, 32], sizes = [2, 32], strides = [1, 1]} : vector<2x128xf32> to vector<2x32xf32>
    %77 = arith.negf %76 : vector<2x32xf32>
    %78 = math.exp %77 : vector<2x32xf32>
    %cst_36 = arith.constant 1.000000e+00 : f32
    %79 = vector.broadcast %cst_36 : f32 to vector<2x32xf32>
    %80 = arith.addf %79, %78 : vector<2x32xf32>
    %81 = arith.divf %79, %80 : vector<2x32xf32>
    %82 = vector.extract_strided_slice %69 {offsets = [0, 64], sizes = [2, 32], strides = [1, 1]} : vector<2x128xf32> to vector<2x32xf32>
    %83 = math.tanh %82 : vector<2x32xf32>
    %84 = vector.extract_strided_slice %69 {offsets = [0, 96], sizes = [2, 32], strides = [1, 1]} : vector<2x128xf32> to vector<2x32xf32>
    %85 = arith.negf %84 : vector<2x32xf32>
    %86 = math.exp %85 : vector<2x32xf32>
    %cst_37 = arith.constant 1.000000e+00 : f32
    %87 = vector.broadcast %cst_37 : f32 to vector<2x32xf32>
    %88 = arith.addf %87, %86 : vector<2x32xf32>
    %89 = arith.divf %87, %88 : vector<2x32xf32>
    %90 = arith.mulf %81, %47 : vector<2x32xf32>
    %91 = arith.mulf %75, %83 : vector<2x32xf32>
    %92 = arith.addf %90, %91 : vector<2x32xf32>
    %93 = math.tanh %92 : vector<2x32xf32>
    %94 = arith.mulf %89, %93 : vector<2x32xf32>
    %cst_38 = arith.constant dense<0.000000e+00> : vector<2x32xf32>
    %95 = tpu.matmul %94, %4, %cst_38 {dimension_numbers = #tpu.dot_dimension_numbers<[1], [0], [0], [1], [0, 0, 1, 1], [], []>} : vector<2x32xf32>, vector<32x32xf32>, vector<2x32xf32> -> vector<2x32xf32>
    %96 = vector.broadcast %5 : vector<1x32xf32> to vector<2x32xf32>
    %97 = arith.addf %95, %96 : vector<2x32xf32>
    %98 = arith.index_cast %c1_i32 : i32 to index
    %c0_39 = arith.constant 0 : index
    %c0_40 = arith.constant 0 : index
    %99 = vector.load %arg9[%98, %c0_39, %c0_40] : memref<8x2x32xf32, #tpu.memory_space<vmem>>, vector<1x2x32xf32>
    %100 = vector.shape_cast %99 : vector<1x2x32xf32> to vector<2x32xf32>
    %101 = vector.shape_cast %97 : vector<2x32xf32> to vector<1x2x32xf32>
    tpu.vector_store %arg9[%98, %c0_39, %c0_40], %101 {strides = array<i32>} : memref<8x2x32xf32, #tpu.memory_space<vmem>>, vector<1x2x32xf32>,
    %c2_i32 = arith.constant 2 : i32
    %102 = arith.index_cast %c2_i32 : i32 to index
    %c0_41 = arith.constant 0 : index
    %c0_42 = arith.constant 0 : index
    %103 = vector.load %arg0[%102, %c0_41, %c0_42] : memref<8x2x1xi32, #tpu.memory_space<vmem>>, vector<1x2x1xi32>
    %104 = vector.shape_cast %103 : vector<1x2x1xi32> to vector<2x1xi32>
    %105 = vector.broadcast %104 : vector<2x1xi32> to vector<2x32xi32>
    %106 = arith.cmpi eq, %7, %105 : vector<2x32xi32>
    %cst_43 = arith.constant 1.000000e+00 : f32
    %cst_44 = arith.constant 0.000000e+00 : f32
    %107 = vector.broadcast %cst_43 : f32 to vector<2x32xf32>
    %108 = vector.broadcast %cst_44 : f32 to vector<2x32xf32>
    %109 = arith.select %106, %107, %108 : vector<2x32xi1>, vector<2x32xf32>
    %cst_45 = arith.constant dense<0.000000e+00> : vector<2x128xf32>
    %110 = tpu.matmul %109, %6, %cst_45 {dimension_numbers = #tpu.dot_dimension_numbers<[1], [0], [0], [1], [0, 0, 1, 1], [], []>} : vector<2x32xf32>, vector<32x128xf32>, vector<2x128xf32> -> vector<2x128xf32>
    %cst_46 = arith.constant dense<0.000000e+00> : vector<2x128xf32>
    %111 = tpu.matmul %94, %2, %cst_46 {dimension_numbers = #tpu.dot_dimension_numbers<[1], [0], [0], [1], [0, 0, 1, 1], [], []>} : vector<2x32xf32>, vector<32x128xf32>, vector<2x128xf32> -> vector<2x128xf32>
    %112 = arith.addf %110, %111 : vector<2x128xf32>
    %113 = vector.broadcast %3 : vector<1x128xf32> to vector<2x128xf32>
    %114 = arith.addf %112, %113 : vector<2x128xf32>
    %115 = vector.extract_strided_slice %114 {offsets = [0, 0], sizes = [2, 32], strides = [1, 1]} : vector<2x128xf32> to vector<2x32xf32>
    %116 = arith.negf %115 : vector<2x32xf32>
    %117 = math.exp %116 : vector<2x32xf32>
    %cst_47 = arith.constant 1.000000e+00 : f32
    %118 = vector.broadcast %cst_47 : f32 to vector<2x32xf32>
    %119 = arith.addf %118, %117 : vector<2x32xf32>
    %120 = arith.divf %118, %119 : vector<2x32xf32>
    %121 = vector.extract_strided_slice %114 {offsets = [0, 32], sizes = [2, 32], strides = [1, 1]} : vector<2x128xf32> to vector<2x32xf32>
    %122 = arith.negf %121 : vector<2x32xf32>
    %123 = math.exp %122 : vector<2x32xf32>
    %cst_48 = arith.constant 1.000000e+00 : f32
    %124 = vector.broadcast %cst_48 : f32 to vector<2x32xf32>
    %125 = arith.addf %124, %123 : vector<2x32xf32>
    %126 = arith.divf %124, %125 : vector<2x32xf32>
    %127 = vector.extract_strided_slice %114 {offsets = [0, 64], sizes = [2, 32], strides = [1, 1]} : vector<2x128xf32> to vector<2x32xf32>
    %128 = math.tanh %127 : vector<2x32xf32>
    %129 = vector.extract_strided_slice %114 {offsets = [0, 96], sizes = [2, 32], strides = [1, 1]} : vector<2x128xf32> to vector<2x32xf32>
    %130 = arith.negf %129 : vector<2x32xf32>
    %131 = math.exp %130 : vector<2x32xf32>
    %cst_49 = arith.constant 1.000000e+00 : f32
    %132 = vector.broadcast %cst_49 : f32 to vector<2x32xf32>
    %133 = arith.addf %132, %131 : vector<2x32xf32>
    %134 = arith.divf %132, %133 : vector<2x32xf32>
    %135 = arith.mulf %126, %92 : vector<2x32xf32>
    %136 = arith.mulf %120, %128 : vector<2x32xf32>
    %137 = arith.addf %135, %136 : vector<2x32xf32>
    %138 = math.tanh %137 : vector<2x32xf32>
    %139 = arith.mulf %134, %138 : vector<2x32xf32>
    %cst_50 = arith.constant dense<0.000000e+00> : vector<2x32xf32>
    %140 = tpu.matmul %139, %4, %cst_50 {dimension_numbers = #tpu.dot_dimension_numbers<[1], [0], [0], [1], [0, 0, 1, 1], [], []>} : vector<2x32xf32>, vector<32x32xf32>, vector<2x32xf32> -> vector<2x32xf32>
    %141 = vector.broadcast %5 : vector<1x32xf32> to vector<2x32xf32>
    %142 = arith.addf %140, %141 : vector<2x32xf32>
    %143 = arith.index_cast %c2_i32 : i32 to index
    %c0_51 = arith.constant 0 : index
    %c0_52 = arith.constant 0 : index
    %144 = vector.load %arg9[%143, %c0_51, %c0_52] : memref<8x2x32xf32, #tpu.memory_space<vmem>>, vector<1x2x32xf32>
    %145 = vector.shape_cast %144 : vector<1x2x32xf32> to vector<2x32xf32>
    %146 = vector.shape_cast %142 : vector<2x32xf32> to vector<1x2x32xf32>
    tpu.vector_store %arg9[%143, %c0_51, %c0_52], %146 {strides = array<i32>} : memref<8x2x32xf32, #tpu.memory_space<vmem>>, vector<1x2x32xf32>,
    %c3_i32 = arith.constant 3 : i32
    %147 = arith.index_cast %c3_i32 : i32 to index
    %c0_53 = arith.constant 0 : index
    %c0_54 = arith.constant 0 : index
    %148 = vector.load %arg0[%147, %c0_53, %c0_54] : memref<8x2x1xi32, #tpu.memory_space<vmem>>, vector<1x2x1xi32>
    %149 = vector.shape_cast %148 : vector<1x2x1xi32> to vector<2x1xi32>
    %150 = vector.broadcast %149 : vector<2x1xi32> to vector<2x32xi32>
    %151 = arith.cmpi eq, %7, %150 : vector<2x32xi32>
    %cst_55 = arith.constant 1.000000e+00 : f32
    %cst_56 = arith.constant 0.000000e+00 : f32
    %152 = vector.broadcast %cst_55 : f32 to vector<2x32xf32>
    %153 = vector.broadcast %cst_56 : f32 to vector<2x32xf32>
    %154 = arith.select %151, %152, %153 : vector<2x32xi1>, vector<2x32xf32>
    %cst_57 = arith.constant dense<0.000000e+00> : vector<2x128xf32>
    %155 = tpu.matmul %154, %6, %cst_57 {dimension_numbers = #tpu.dot_dimension_numbers<[1], [0], [0], [1], [0, 0, 1, 1], [], []>} : vector<2x32xf32>, vector<32x128xf32>, vector<2x128xf32> -> vector<2x128xf32>
    %cst_58 = arith.constant dense<0.000000e+00> : vector<2x128xf32>
    %156 = tpu.matmul %139, %2, %cst_58 {dimension_numbers = #tpu.dot_dimension_numbers<[1], [0], [0], [1], [0, 0, 1, 1], [], []>} : vector<2x32xf32>, vector<32x128xf32>, vector<2x128xf32> -> vector<2x128xf32>
    %157 = arith.addf %155, %156 : vector<2x128xf32>
    %158 = vector.broadcast %3 : vector<1x128xf32> to vector<2x128xf32>
    %159 = arith.addf %157, %158 : vector<2x128xf32>
    %160 = vector.extract_strided_slice %159 {offsets = [0, 0], sizes = [2, 32], strides = [1, 1]} : vector<2x128xf32> to vector<2x32xf32>
    %161 = arith.negf %160 : vector<2x32xf32>
    %162 = math.exp %161 : vector<2x32xf32>
    %cst_59 = arith.constant 1.000000e+00 : f32
    %163 = vector.broadcast %cst_59 : f32 to vector<2x32xf32>
    %164 = arith.addf %163, %162 : vector<2x32xf32>
    %165 = arith.divf %163, %164 : vector<2x32xf32>
    %166 = vector.extract_strided_slice %159 {offsets = [0, 32], sizes = [2, 32], strides = [1, 1]} : vector<2x128xf32> to vector<2x32xf32>
    %167 = arith.negf %166 : vector<2x32xf32>
    %168 = math.exp %167 : vector<2x32xf32>
    %cst_60 = arith.constant 1.000000e+00 : f32
    %169 = vector.broadcast %cst_60 : f32 to vector<2x32xf32>
    %170 = arith.addf %169, %168 : vector<2x32xf32>
    %171 = arith.divf %169, %170 : vector<2x32xf32>
    %172 = vector.extract_strided_slice %159 {offsets = [0, 64], sizes = [2, 32], strides = [1, 1]} : vector<2x128xf32> to vector<2x32xf32>
    %173 = math.tanh %172 : vector<2x32xf32>
    %174 = vector.extract_strided_slice %159 {offsets = [0, 96], sizes = [2, 32], strides = [1, 1]} : vector<2x128xf32> to vector<2x32xf32>
    %175 = arith.negf %174 : vector<2x32xf32>
    %176 = math.exp %175 : vector<2x32xf32>
    %cst_61 = arith.constant 1.000000e+00 : f32
    %177 = vector.broadcast %cst_61 : f32 to vector<2x32xf32>
    %178 = arith.addf %177, %176 : vector<2x32xf32>
    %179 = arith.divf %177, %178 : vector<2x32xf32>
    %180 = arith.mulf %171, %137 : vector<2x32xf32>
    %181 = arith.mulf %165, %173 : vector<2x32xf32>
    %182 = arith.addf %180, %181 : vector<2x32xf32>
    %183 = math.tanh %182 : vector<2x32xf32>
    %184 = arith.mulf %179, %183 : vector<2x32xf32>
    %cst_62 = arith.constant dense<0.000000e+00> : vector<2x32xf32>
    %185 = tpu.matmul %184, %4, %cst_62 {dimension_numbers = #tpu.dot_dimension_numbers<[1], [0], [0], [1], [0, 0, 1, 1], [], []>} : vector<2x32xf32>, vector<32x32xf32>, vector<2x32xf32> -> vector<2x32xf32>
    %186 = vector.broadcast %5 : vector<1x32xf32> to vector<2x32xf32>
    %187 = arith.addf %185, %186 : vector<2x32xf32>
    %188 = arith.index_cast %c3_i32 : i32 to index
    %c0_63 = arith.constant 0 : index
    %c0_64 = arith.constant 0 : index
    %189 = vector.load %arg9[%188, %c0_63, %c0_64] : memref<8x2x32xf32, #tpu.memory_space<vmem>>, vector<1x2x32xf32>
    %190 = vector.shape_cast %189 : vector<1x2x32xf32> to vector<2x32xf32>
    %191 = vector.shape_cast %187 : vector<2x32xf32> to vector<1x2x32xf32>
    tpu.vector_store %arg9[%188, %c0_63, %c0_64], %191 {strides = array<i32>} : memref<8x2x32xf32, #tpu.memory_space<vmem>>, vector<1x2x32xf32>,
    %c4_i32 = arith.constant 4 : i32
    %192 = arith.index_cast %c4_i32 : i32 to index
    %c0_65 = arith.constant 0 : index
    %c0_66 = arith.constant 0 : index
    %193 = vector.load %arg0[%192, %c0_65, %c0_66] : memref<8x2x1xi32, #tpu.memory_space<vmem>>, vector<1x2x1xi32>
    %194 = vector.shape_cast %193 : vector<1x2x1xi32> to vector<2x1xi32>
    %195 = vector.broadcast %194 : vector<2x1xi32> to vector<2x32xi32>
    %196 = arith.cmpi eq, %7, %195 : vector<2x32xi32>
    %cst_67 = arith.constant 1.000000e+00 : f32
    %cst_68 = arith.constant 0.000000e+00 : f32
    %197 = vector.broadcast %cst_67 : f32 to vector<2x32xf32>
    %198 = vector.broadcast %cst_68 : f32 to vector<2x32xf32>
    %199 = arith.select %196, %197, %198 : vector<2x32xi1>, vector<2x32xf32>
    %cst_69 = arith.constant dense<0.000000e+00> : vector<2x128xf32>
    %200 = tpu.matmul %199, %6, %cst_69 {dimension_numbers = #tpu.dot_dimension_numbers<[1], [0], [0], [1], [0, 0, 1, 1], [], []>} : vector<2x32xf32>, vector<32x128xf32>, vector<2x128xf32> -> vector<2x128xf32>
    %cst_70 = arith.constant dense<0.000000e+00> : vector<2x128xf32>
    %201 = tpu.matmul %184, %2, %cst_70 {dimension_numbers = #tpu.dot_dimension_numbers<[1], [0], [0], [1], [0, 0, 1, 1], [], []>} : vector<2x32xf32>, vector<32x128xf32>, vector<2x128xf32> -> vector<2x128xf32>
    %202 = arith.addf %200, %201 : vector<2x128xf32>
    %203 = vector.broadcast %3 : vector<1x128xf32> to vector<2x128xf32>
    %204 = arith.addf %202, %203 : vector<2x128xf32>
    %205 = vector.extract_strided_slice %204 {offsets = [0, 0], sizes = [2, 32], strides = [1, 1]} : vector<2x128xf32> to vector<2x32xf32>
    %206 = arith.negf %205 : vector<2x32xf32>
    %207 = math.exp %206 : vector<2x32xf32>
    %cst_71 = arith.constant 1.000000e+00 : f32
    %208 = vector.broadcast %cst_71 : f32 to vector<2x32xf32>
    %209 = arith.addf %208, %207 : vector<2x32xf32>
    %210 = arith.divf %208, %209 : vector<2x32xf32>
    %211 = vector.extract_strided_slice %204 {offsets = [0, 32], sizes = [2, 32], strides = [1, 1]} : vector<2x128xf32> to vector<2x32xf32>
    %212 = arith.negf %211 : vector<2x32xf32>
    %213 = math.exp %212 : vector<2x32xf32>
    %cst_72 = arith.constant 1.000000e+00 : f32
    %214 = vector.broadcast %cst_72 : f32 to vector<2x32xf32>
    %215 = arith.addf %214, %213 : vector<2x32xf32>
    %216 = arith.divf %214, %215 : vector<2x32xf32>
    %217 = vector.extract_strided_slice %204 {offsets = [0, 64], sizes = [2, 32], strides = [1, 1]} : vector<2x128xf32> to vector<2x32xf32>
    %218 = math.tanh %217 : vector<2x32xf32>
    %219 = vector.extract_strided_slice %204 {offsets = [0, 96], sizes = [2, 32], strides = [1, 1]} : vector<2x128xf32> to vector<2x32xf32>
    %220 = arith.negf %219 : vector<2x32xf32>
    %221 = math.exp %220 : vector<2x32xf32>
    %cst_73 = arith.constant 1.000000e+00 : f32
    %222 = vector.broadcast %cst_73 : f32 to vector<2x32xf32>
    %223 = arith.addf %222, %221 : vector<2x32xf32>
    %224 = arith.divf %222, %223 : vector<2x32xf32>
    %225 = arith.mulf %216, %182 : vector<2x32xf32>
    %226 = arith.mulf %210, %218 : vector<2x32xf32>
    %227 = arith.addf %225, %226 : vector<2x32xf32>
    %228 = math.tanh %227 : vector<2x32xf32>
    %229 = arith.mulf %224, %228 : vector<2x32xf32>
    %cst_74 = arith.constant dense<0.000000e+00> : vector<2x32xf32>
    %230 = tpu.matmul %229, %4, %cst_74 {dimension_numbers = #tpu.dot_dimension_numbers<[1], [0], [0], [1], [0, 0, 1, 1], [], []>} : vector<2x32xf32>, vector<32x32xf32>, vector<2x32xf32> -> vector<2x32xf32>
    %231 = vector.broadcast %5 : vector<1x32xf32> to vector<2x32xf32>
    %232 = arith.addf %230, %231 : vector<2x32xf32>
    %233 = arith.index_cast %c4_i32 : i32 to index
    %c0_75 = arith.constant 0 : index
    %c0_76 = arith.constant 0 : index
    %234 = vector.load %arg9[%233, %c0_75, %c0_76] : memref<8x2x32xf32, #tpu.memory_space<vmem>>, vector<1x2x32xf32>
    %235 = vector.shape_cast %234 : vector<1x2x32xf32> to vector<2x32xf32>
    %236 = vector.shape_cast %232 : vector<2x32xf32> to vector<1x2x32xf32>
    tpu.vector_store %arg9[%233, %c0_75, %c0_76], %236 {strides = array<i32>} : memref<8x2x32xf32, #tpu.memory_space<vmem>>, vector<1x2x32xf32>,
    %c5_i32 = arith.constant 5 : i32
    %237 = arith.index_cast %c5_i32 : i32 to index
    %c0_77 = arith.constant 0 : index
    %c0_78 = arith.constant 0 : index
    %238 = vector.load %arg0[%237, %c0_77, %c0_78] : memref<8x2x1xi32, #tpu.memory_space<vmem>>, vector<1x2x1xi32>
    %239 = vector.shape_cast %238 : vector<1x2x1xi32> to vector<2x1xi32>
    %240 = vector.broadcast %239 : vector<2x1xi32> to vector<2x32xi32>
    %241 = arith.cmpi eq, %7, %240 : vector<2x32xi32>
    %cst_79 = arith.constant 1.000000e+00 : f32
    %cst_80 = arith.constant 0.000000e+00 : f32
    %242 = vector.broadcast %cst_79 : f32 to vector<2x32xf32>
    %243 = vector.broadcast %cst_80 : f32 to vector<2x32xf32>
    %244 = arith.select %241, %242, %243 : vector<2x32xi1>, vector<2x32xf32>
    %cst_81 = arith.constant dense<0.000000e+00> : vector<2x128xf32>
    %245 = tpu.matmul %244, %6, %cst_81 {dimension_numbers = #tpu.dot_dimension_numbers<[1], [0], [0], [1], [0, 0, 1, 1], [], []>} : vector<2x32xf32>, vector<32x128xf32>, vector<2x128xf32> -> vector<2x128xf32>
    %cst_82 = arith.constant dense<0.000000e+00> : vector<2x128xf32>
    %246 = tpu.matmul %229, %2, %cst_82 {dimension_numbers = #tpu.dot_dimension_numbers<[1], [0], [0], [1], [0, 0, 1, 1], [], []>} : vector<2x32xf32>, vector<32x128xf32>, vector<2x128xf32> -> vector<2x128xf32>
    %247 = arith.addf %245, %246 : vector<2x128xf32>
    %248 = vector.broadcast %3 : vector<1x128xf32> to vector<2x128xf32>
    %249 = arith.addf %247, %248 : vector<2x128xf32>
    %250 = vector.extract_strided_slice %249 {offsets = [0, 0], sizes = [2, 32], strides = [1, 1]} : vector<2x128xf32> to vector<2x32xf32>
    %251 = arith.negf %250 : vector<2x32xf32>
    %252 = math.exp %251 : vector<2x32xf32>
    %cst_83 = arith.constant 1.000000e+00 : f32
    %253 = vector.broadcast %cst_83 : f32 to vector<2x32xf32>
    %254 = arith.addf %253, %252 : vector<2x32xf32>
    %255 = arith.divf %253, %254 : vector<2x32xf32>
    %256 = vector.extract_strided_slice %249 {offsets = [0, 32], sizes = [2, 32], strides = [1, 1]} : vector<2x128xf32> to vector<2x32xf32>
    %257 = arith.negf %256 : vector<2x32xf32>
    %258 = math.exp %257 : vector<2x32xf32>
    %cst_84 = arith.constant 1.000000e+00 : f32
    %259 = vector.broadcast %cst_84 : f32 to vector<2x32xf32>
    %260 = arith.addf %259, %258 : vector<2x32xf32>
    %261 = arith.divf %259, %260 : vector<2x32xf32>
    %262 = vector.extract_strided_slice %249 {offsets = [0, 64], sizes = [2, 32], strides = [1, 1]} : vector<2x128xf32> to vector<2x32xf32>
    %263 = math.tanh %262 : vector<2x32xf32>
    %264 = vector.extract_strided_slice %249 {offsets = [0, 96], sizes = [2, 32], strides = [1, 1]} : vector<2x128xf32> to vector<2x32xf32>
    %265 = arith.negf %264 : vector<2x32xf32>
    %266 = math.exp %265 : vector<2x32xf32>
    %cst_85 = arith.constant 1.000000e+00 : f32
    %267 = vector.broadcast %cst_85 : f32 to vector<2x32xf32>
    %268 = arith.addf %267, %266 : vector<2x32xf32>
    %269 = arith.divf %267, %268 : vector<2x32xf32>
    %270 = arith.mulf %261, %227 : vector<2x32xf32>
    %271 = arith.mulf %255, %263 : vector<2x32xf32>
    %272 = arith.addf %270, %271 : vector<2x32xf32>
    %273 = math.tanh %272 : vector<2x32xf32>
    %274 = arith.mulf %269, %273 : vector<2x32xf32>
    %cst_86 = arith.constant dense<0.000000e+00> : vector<2x32xf32>
    %275 = tpu.matmul %274, %4, %cst_86 {dimension_numbers = #tpu.dot_dimension_numbers<[1], [0], [0], [1], [0, 0, 1, 1], [], []>} : vector<2x32xf32>, vector<32x32xf32>, vector<2x32xf32> -> vector<2x32xf32>
    %276 = vector.broadcast %5 : vector<1x32xf32> to vector<2x32xf32>
    %277 = arith.addf %275, %276 : vector<2x32xf32>
    %278 = arith.index_cast %c5_i32 : i32 to index
    %c0_87 = arith.constant 0 : index
    %c0_88 = arith.constant 0 : index
    %279 = vector.load %arg9[%278, %c0_87, %c0_88] : memref<8x2x32xf32, #tpu.memory_space<vmem>>, vector<1x2x32xf32>
    %280 = vector.shape_cast %279 : vector<1x2x32xf32> to vector<2x32xf32>
    %281 = vector.shape_cast %277 : vector<2x32xf32> to vector<1x2x32xf32>
    tpu.vector_store %arg9[%278, %c0_87, %c0_88], %281 {strides = array<i32>} : memref<8x2x32xf32, #tpu.memory_space<vmem>>, vector<1x2x32xf32>,
    %c6_i32 = arith.constant 6 : i32
    %282 = arith.index_cast %c6_i32 : i32 to index
    %c0_89 = arith.constant 0 : index
    %c0_90 = arith.constant 0 : index
    %283 = vector.load %arg0[%282, %c0_89, %c0_90] : memref<8x2x1xi32, #tpu.memory_space<vmem>>, vector<1x2x1xi32>
    %284 = vector.shape_cast %283 : vector<1x2x1xi32> to vector<2x1xi32>
    %285 = vector.broadcast %284 : vector<2x1xi32> to vector<2x32xi32>
    %286 = arith.cmpi eq, %7, %285 : vector<2x32xi32>
    %cst_91 = arith.constant 1.000000e+00 : f32
    %cst_92 = arith.constant 0.000000e+00 : f32
    %287 = vector.broadcast %cst_91 : f32 to vector<2x32xf32>
    %288 = vector.broadcast %cst_92 : f32 to vector<2x32xf32>
    %289 = arith.select %286, %287, %288 : vector<2x32xi1>, vector<2x32xf32>
    %cst_93 = arith.constant dense<0.000000e+00> : vector<2x128xf32>
    %290 = tpu.matmul %289, %6, %cst_93 {dimension_numbers = #tpu.dot_dimension_numbers<[1], [0], [0], [1], [0, 0, 1, 1], [], []>} : vector<2x32xf32>, vector<32x128xf32>, vector<2x128xf32> -> vector<2x128xf32>
    %cst_94 = arith.constant dense<0.000000e+00> : vector<2x128xf32>
    %291 = tpu.matmul %274, %2, %cst_94 {dimension_numbers = #tpu.dot_dimension_numbers<[1], [0], [0], [1], [0, 0, 1, 1], [], []>} : vector<2x32xf32>, vector<32x128xf32>, vector<2x128xf32> -> vector<2x128xf32>
    %292 = arith.addf %290, %291 : vector<2x128xf32>
    %293 = vector.broadcast %3 : vector<1x128xf32> to vector<2x128xf32>
    %294 = arith.addf %292, %293 : vector<2x128xf32>
    %295 = vector.extract_strided_slice %294 {offsets = [0, 0], sizes = [2, 32], strides = [1, 1]} : vector<2x128xf32> to vector<2x32xf32>
    %296 = arith.negf %295 : vector<2x32xf32>
    %297 = math.exp %296 : vector<2x32xf32>
    %cst_95 = arith.constant 1.000000e+00 : f32
    %298 = vector.broadcast %cst_95 : f32 to vector<2x32xf32>
    %299 = arith.addf %298, %297 : vector<2x32xf32>
    %300 = arith.divf %298, %299 : vector<2x32xf32>
    %301 = vector.extract_strided_slice %294 {offsets = [0, 32], sizes = [2, 32], strides = [1, 1]} : vector<2x128xf32> to vector<2x32xf32>
    %302 = arith.negf %301 : vector<2x32xf32>
    %303 = math.exp %302 : vector<2x32xf32>
    %cst_96 = arith.constant 1.000000e+00 : f32
    %304 = vector.broadcast %cst_96 : f32 to vector<2x32xf32>
    %305 = arith.addf %304, %303 : vector<2x32xf32>
    %306 = arith.divf %304, %305 : vector<2x32xf32>
    %307 = vector.extract_strided_slice %294 {offsets = [0, 64], sizes = [2, 32], strides = [1, 1]} : vector<2x128xf32> to vector<2x32xf32>
    %308 = math.tanh %307 : vector<2x32xf32>
    %309 = vector.extract_strided_slice %294 {offsets = [0, 96], sizes = [2, 32], strides = [1, 1]} : vector<2x128xf32> to vector<2x32xf32>
    %310 = arith.negf %309 : vector<2x32xf32>
    %311 = math.exp %310 : vector<2x32xf32>
    %cst_97 = arith.constant 1.000000e+00 : f32
    %312 = vector.broadcast %cst_97 : f32 to vector<2x32xf32>
    %313 = arith.addf %312, %311 : vector<2x32xf32>
    %314 = arith.divf %312, %313 : vector<2x32xf32>
    %315 = arith.mulf %306, %272 : vector<2x32xf32>
    %316 = arith.mulf %300, %308 : vector<2x32xf32>
    %317 = arith.addf %315, %316 : vector<2x32xf32>
    %318 = math.tanh %317 : vector<2x32xf32>
    %319 = arith.mulf %314, %318 : vector<2x32xf32>
    %cst_98 = arith.constant dense<0.000000e+00> : vector<2x32xf32>
    %320 = tpu.matmul %319, %4, %cst_98 {dimension_numbers = #tpu.dot_dimension_numbers<[1], [0], [0], [1], [0, 0, 1, 1], [], []>} : vector<2x32xf32>, vector<32x32xf32>, vector<2x32xf32> -> vector<2x32xf32>
    %321 = vector.broadcast %5 : vector<1x32xf32> to vector<2x32xf32>
    %322 = arith.addf %320, %321 : vector<2x32xf32>
    %323 = arith.index_cast %c6_i32 : i32 to index
    %c0_99 = arith.constant 0 : index
    %c0_100 = arith.constant 0 : index
    %324 = vector.load %arg9[%323, %c0_99, %c0_100] : memref<8x2x32xf32, #tpu.memory_space<vmem>>, vector<1x2x32xf32>
    %325 = vector.shape_cast %324 : vector<1x2x32xf32> to vector<2x32xf32>
    %326 = vector.shape_cast %322 : vector<2x32xf32> to vector<1x2x32xf32>
    tpu.vector_store %arg9[%323, %c0_99, %c0_100], %326 {strides = array<i32>} : memref<8x2x32xf32, #tpu.memory_space<vmem>>, vector<1x2x32xf32>,
    %c7_i32 = arith.constant 7 : i32
    %327 = arith.index_cast %c7_i32 : i32 to index
    %c0_101 = arith.constant 0 : index
    %c0_102 = arith.constant 0 : index
    %328 = vector.load %arg0[%327, %c0_101, %c0_102] : memref<8x2x1xi32, #tpu.memory_space<vmem>>, vector<1x2x1xi32>
    %329 = vector.shape_cast %328 : vector<1x2x1xi32> to vector<2x1xi32>
    %330 = vector.broadcast %329 : vector<2x1xi32> to vector<2x32xi32>
    %331 = arith.cmpi eq, %7, %330 : vector<2x32xi32>
    %cst_103 = arith.constant 1.000000e+00 : f32
    %cst_104 = arith.constant 0.000000e+00 : f32
    %332 = vector.broadcast %cst_103 : f32 to vector<2x32xf32>
    %333 = vector.broadcast %cst_104 : f32 to vector<2x32xf32>
    %334 = arith.select %331, %332, %333 : vector<2x32xi1>, vector<2x32xf32>
    %cst_105 = arith.constant dense<0.000000e+00> : vector<2x128xf32>
    %335 = tpu.matmul %334, %6, %cst_105 {dimension_numbers = #tpu.dot_dimension_numbers<[1], [0], [0], [1], [0, 0, 1, 1], [], []>} : vector<2x32xf32>, vector<32x128xf32>, vector<2x128xf32> -> vector<2x128xf32>
    %cst_106 = arith.constant dense<0.000000e+00> : vector<2x128xf32>
    %336 = tpu.matmul %319, %2, %cst_106 {dimension_numbers = #tpu.dot_dimension_numbers<[1], [0], [0], [1], [0, 0, 1, 1], [], []>} : vector<2x32xf32>, vector<32x128xf32>, vector<2x128xf32> -> vector<2x128xf32>
    %337 = arith.addf %335, %336 : vector<2x128xf32>
    %338 = vector.broadcast %3 : vector<1x128xf32> to vector<2x128xf32>
    %339 = arith.addf %337, %338 : vector<2x128xf32>
    %340 = vector.extract_strided_slice %339 {offsets = [0, 0], sizes = [2, 32], strides = [1, 1]} : vector<2x128xf32> to vector<2x32xf32>
    %341 = arith.negf %340 : vector<2x32xf32>
    %342 = math.exp %341 : vector<2x32xf32>
    %cst_107 = arith.constant 1.000000e+00 : f32
    %343 = vector.broadcast %cst_107 : f32 to vector<2x32xf32>
    %344 = arith.addf %343, %342 : vector<2x32xf32>
    %345 = arith.divf %343, %344 : vector<2x32xf32>
    %346 = vector.extract_strided_slice %339 {offsets = [0, 32], sizes = [2, 32], strides = [1, 1]} : vector<2x128xf32> to vector<2x32xf32>
    %347 = arith.negf %346 : vector<2x32xf32>
    %348 = math.exp %347 : vector<2x32xf32>
    %cst_108 = arith.constant 1.000000e+00 : f32
    %349 = vector.broadcast %cst_108 : f32 to vector<2x32xf32>
    %350 = arith.addf %349, %348 : vector<2x32xf32>
    %351 = arith.divf %349, %350 : vector<2x32xf32>
    %352 = vector.extract_strided_slice %339 {offsets = [0, 64], sizes = [2, 32], strides = [1, 1]} : vector<2x128xf32> to vector<2x32xf32>
    %353 = math.tanh %352 : vector<2x32xf32>
    %354 = vector.extract_strided_slice %339 {offsets = [0, 96], sizes = [2, 32], strides = [1, 1]} : vector<2x128xf32> to vector<2x32xf32>
    %355 = arith.negf %354 : vector<2x32xf32>
    %356 = math.exp %355 : vector<2x32xf32>
    %cst_109 = arith.constant 1.000000e+00 : f32
    %357 = vector.broadcast %cst_109 : f32 to vector<2x32xf32>
    %358 = arith.addf %357, %356 : vector<2x32xf32>
    %359 = arith.divf %357, %358 : vector<2x32xf32>
    %360 = arith.mulf %351, %317 : vector<2x32xf32>
    %361 = arith.mulf %345, %353 : vector<2x32xf32>
    %362 = arith.addf %360, %361 : vector<2x32xf32>
    %363 = math.tanh %362 : vector<2x32xf32>
    %364 = arith.mulf %359, %363 : vector<2x32xf32>
    %cst_110 = arith.constant dense<0.000000e+00> : vector<2x32xf32>
    %365 = tpu.matmul %364, %4, %cst_110 {dimension_numbers = #tpu.dot_dimension_numbers<[1], [0], [0], [1], [0, 0, 1, 1], [], []>} : vector<2x32xf32>, vector<32x32xf32>, vector<2x32xf32> -> vector<2x32xf32>
    %366 = vector.broadcast %5 : vector<1x32xf32> to vector<2x32xf32>
    %367 = arith.addf %365, %366 : vector<2x32xf32>
    %368 = arith.index_cast %c7_i32 : i32 to index
    %c0_111 = arith.constant 0 : index
    %c0_112 = arith.constant 0 : index
    %369 = vector.load %arg9[%368, %c0_111, %c0_112] : memref<8x2x32xf32, #tpu.memory_space<vmem>>, vector<1x2x32xf32>
    %370 = vector.shape_cast %369 : vector<1x2x32xf32> to vector<2x32xf32>
    %371 = vector.shape_cast %367 : vector<2x32xf32> to vector<1x2x32xf32>
    tpu.vector_store %arg9[%368, %c0_111, %c0_112], %371 {strides = array<i32>} : memref<8x2x32xf32, #tpu.memory_space<vmem>>, vector<1x2x32xf32>,
    %c8_i32 = arith.constant 8 : i32
    %c0_113 = arith.constant 0 : index
    %c0_114 = arith.constant 0 : index
    %c0_115 = arith.constant 0 : index
    %372 = vector.load %arg10[%c0_113, %c0_114, %c0_115] : memref<1x2x32xf32, #tpu.memory_space<vmem>>, vector<1x2x32xf32>
    %373 = vector.shape_cast %372 : vector<1x2x32xf32> to vector<2x32xf32>
    %374 = vector.shape_cast %364 : vector<2x32xf32> to vector<1x2x32xf32>
    tpu.vector_store %arg10[%c0_113, %c0_114, %c0_115], %374 {strides = array<i32>} : memref<1x2x32xf32, #tpu.memory_space<vmem>>, vector<1x2x32xf32>,
    %c0_116 = arith.constant 0 : index
    %c0_117 = arith.constant 0 : index
    %c0_118 = arith.constant 0 : index
    %375 = vector.load %arg11[%c0_116, %c0_117, %c0_118] : memref<1x2x32xf32, #tpu.memory_space<vmem>>, vector<1x2x32xf32>
    %376 = vector.shape_cast %375 : vector<1x2x32xf32> to vector<2x32xf32>
    %377 = vector.shape_cast %362 : vector<2x32xf32> to vector<1x2x32xf32>
    tpu.vector_store %arg11[%c0_116, %c0_117, %c0_118], %377 {strides = array<i32>} : memref<1x2x32xf32, #tpu.memory_space<vmem>>, vector<1x2x32xf32>,
    return
  }
}

</mosaic_0001>

<llo_original>
// kernel: tpu_custom_call.1
$region0: #{tpu_custom_call.1}
  #allocation0 [shape = 'u32[]', space=smem, size = 0x4, offset = 0x4, fixed_abs, tag = 'smem constant byte address 0x4 - core index']
  #allocation1 [shape = 'u32[144,128]{1,0:T(1,128)}', space=vmem, size = 0x12000, scoped, tag = 'internal scratch']
  %s0 = inlined_call_operand.vmem [shape: s32[8,2,1], index: 0, kind: input, shape index: {}]
  %s1 = inlined_call_operand.vmem [shape: f32[32,16], index: 1, kind: input, shape index: {}]
  %s2 = inlined_call_operand.hbm [shape: f32[16,128], index: 2, kind: input, shape index: {}]
  %s3 = inlined_call_operand.vmem [shape: f32[32,128], index: 3, kind: input, shape index: {}]
  %s4 = inlined_call_operand.vmem [shape: f32[1,128], index: 4, kind: input, shape index: {}]
  %s5 = inlined_call_operand.vmem [shape: f32[1,2,32], index: 5, kind: input, shape index: {}]
  %s6 = inlined_call_operand.vmem [shape: f32[1,2,32], index: 6, kind: input, shape index: {}]
  %s7 = inlined_call_operand.vmem [shape: f32[32,32], index: 7, kind: input, shape index: {}]
  %s8 = inlined_call_operand.vmem [shape: f32[1,32], index: 8, kind: input, shape index: {}]
  %s9 = inlined_call_operand.hbm [shape: f32[8,2,32], index: 9, kind: output, shape index: {0}]
  %s10 = inlined_call_operand.hbm [shape: f32[1,2,32], index: 10, kind: output, shape index: {1}]
  %s11 = inlined_call_operand.hbm [shape: f32[1,2,32], index: 11, kind: output, shape index: {2}]
  %12 = xla_tuple %s9, %s10, %s11
  %s13 = sld [smem:[#allocation0]]
  $region66: #{tpu_custom_call.1} parent=0
    _
  %s15 = ssub.s32 1, %s13
  %s16 = scalar_select 0, %s15, %s13
  $region1: #{tpu_custom_call.1} parent=0
    #allocation2 [shape = 'u8[8192]{0}', space=vmem, size = 0x2000, scoped, tag = 'input window, operand 2, single buffered']
    #allocation3 [shape = 's32[1]{0}', space=sflag, size = 0x4, scoped, tag = 'scoped memory for tpu_custom_call.1']
    #allocation4 [shape = 's32[1]{0}', space=sflag, size = 0x4, scoped, tag = 'scoped memory for tpu_custom_call.1']
    #allocation5 [shape = 'u8[8192]{0}', space=vmem, size = 0x2000, scoped, tag = 'output window, operand 0, single buffered']
    #allocation6 [shape = 'u8[1024]{0}', space=vmem, size = 0x400, scoped, tag = 'output window, operand 1, single buffered']
    #allocation7 [shape = 's32[1]{0}', space=sflag, size = 0x4, scoped, tag = 'scoped memory for tpu_custom_call.1']
    #allocation8 [shape = 'u8[1024]{0}', space=vmem, size = 0x400, scoped, tag = 'output window, operand 2, single buffered']
    %17 = vsyncpa [#allocation3], 0
    %18 = vsyncpa [#allocation4], 0
    %19 = vsyncpa [#allocation7], 0
    // Predicated region
    $region2: #{tpu_custom_call.1} parent=1 // pred_check
      _
    $region3: #{tpu_custom_call.1} parent=1 // pred_check_branch
      %21 = sbr.rel (0) target = $region5
    $region4: #{tpu_custom_call.1} parent=1 // pred_region
      _
    $region5: #{tpu_custom_call.1} parent=1 // pred_fallthru
      _
    // Predicated region
    $region6: #{tpu_custom_call.1} parent=1 // pred_check
      _
    $region7: #{tpu_custom_call.1} parent=1 // pred_check_branch
      %23 = sbr.rel (0) target = $region9
    $region8: #{tpu_custom_call.1} parent=1 // pred_region
      _
    $region9: #{tpu_custom_call.1} parent=1 // pred_fallthru
      _
    // Predicated region
    $region10: #{tpu_custom_call.1} parent=1 // pred_check
      _
    $region11: #{tpu_custom_call.1} parent=1 // pred_check_branch
      %25 = sbr.rel (0) target = $region13
    $region12: #{tpu_custom_call.1} parent=1 // pred_region
      %s27 = ssub.s32 256, 256
      %28 = vsyncadd [#allocation3], %s27
      %s29 = sshll.u32 [#allocation2], 4
      %s30 = int_to_ptr.vmem [resolvable:$true] %s29
      %35 = dma.hbm_to_vmem [thread:$0]  %s2, 256, %s30, [#allocation3], 128, 128, 8
    $region13: #{tpu_custom_call.1} parent=1 // pred_fallthru
      _
    // Predicated region
    $region14: #{tpu_custom_call.1} parent=1 // pred_check
      _
    $region15: #{tpu_custom_call.1} parent=1 // pred_check_branch
      %37 = sbr.rel (0) target = $region17
    $region16: #{tpu_custom_call.1} parent=1 // pred_region
      _
    $region17: #{tpu_custom_call.1} parent=1 // pred_fallthru
      _
    // Predicated region
    $region18: #{tpu_custom_call.1} parent=1 // pred_check
      _
    $region19: #{tpu_custom_call.1} parent=1 // pred_check_branch
      %39 = sbr.rel (0) target = $region21
    $region20: #{tpu_custom_call.1} parent=1 // pred_region
      _
    $region21: #{tpu_custom_call.1} parent=1 // pred_fallthru
      _
    // Predicated region
    $region22: #{tpu_custom_call.1} parent=1 // pred_check
      _
    $region23: #{tpu_custom_call.1} parent=1 // pred_check_branch
      %41 = sbr.rel (0) target = $region25
    $region24: #{tpu_custom_call.1} parent=1 // pred_region
      _
    $region25: #{tpu_custom_call.1} parent=1 // pred_fallthru
      _
    // Predicated region
    $region26: #{tpu_custom_call.1} parent=1 // pred_check
      _
    $region27: #{tpu_custom_call.1} parent=1 // pred_check_branch
      %43 = sbr.rel (0) target = $region29
    $region28: #{tpu_custom_call.1} parent=1 // pred_region
      _
    $region29: #{tpu_custom_call.1} parent=1 // pred_fallthru
      _
    // Predicated region
    $region30: #{tpu_custom_call.1} parent=1 // pred_check
      _
    $region31: #{tpu_custom_call.1} parent=1 // pred_check_branch
      %45 = sbr.rel (0) target = $region33
    $region32: #{tpu_custom_call.1} parent=1 // pred_region
      _
    $region33: #{tpu_custom_call.1} parent=1 // pred_fallthru
      _
    // Predicated region
    $region34: #{tpu_custom_call.1} parent=1 // pred_check
      _
    $region35: #{tpu_custom_call.1} parent=1 // pred_check_branch
      %47 = sbr.rel (0) target = $region37
    $region36: #{tpu_custom_call.1} parent=1 // pred_region
      _
    $region37: #{tpu_custom_call.1} parent=1 // pred_fallthru
      _
    // Predicated region
    $region38: #{tpu_custom_call.1} parent=1 // pred_check
      _
    $region39: #{tpu_custom_call.1} parent=1 // pred_check_branch
      %49 = sbr.rel (0) target = $region41
    $region40: #{tpu_custom_call.1} parent=1 // pred_region
      %50 = dma.done [#allocation3], 256
    $region41: #{tpu_custom_call.1} parent=1 // pred_fallthru
      _
    %v51 = vld [vmem:[%s1] sm:$0xff]
    %v52 = vld [vmem:[%s1 + $0x8] sm:$0xff]
    %v53 = vld [vmem:[%s1 + $0x10] sm:$0xff]
    %v54 = vld [vmem:[%s1 + $0x18] sm:$0xff]
    %v55 = vld [vmem:[#allocation2] sm:$0xff]
    %v56 = vld [vmem:[#allocation2 + $0x8] sm:$0xff]
    %v57 = vld [vmem:[%s3] sm:$0xff]
    %v58 = vld [vmem:[%s3 + $0x8] sm:$0xff]
    %v59 = vld [vmem:[%s3 + $0x10] sm:$0xff]
    %v60 = vld [vmem:[%s3 + $0x18] sm:$0xff]
    %v61 = vld [vmem:[%s4] sm:$0x1]
    %v62 = vld [vmem:[%s7] sm:$0xff]
    %v63 = vld [vmem:[%s7 + $0x8] sm:$0xff]
    %v64 = vld [vmem:[%s7 + $0x10] sm:$0xff]
    %v65 = vld [vmem:[%s7 + $0x18] sm:$0xff]
    %v66 = vld [vmem:[%s8] sm:$0x1]
    %vm67 = vcmask 130048
    %v69 = vsel %vm67, %v51, 0
    %v72 = vsel %vm67, %v52, 0
    %v75 = vsel %vm67, %v53, 0
    %v78 = vsel %vm67, %v54, 0
    %80 = vmatprep.subr.mxu0 0.0
    %81 = vmatpush1.msra.mxu0 %v55
    %82 = vmatprep.subr.mxu0 0.0
    %83 = vmatpush1.msra.mxu0 %v56
    %84 = vmatprep.subr.mxu0 0.0
    %85 = vmatpush1.msra.mxu0 0.0
    %86 = vmatprep.subr.mxu0 0.0
    %87 = vmatpush1.msra.mxu0 0.0
    %88 = vmatprep.subr.mxu0 0.0
    %89 = vmatpush1.msra.mxu0 0.0
    %90 = vmatprep.subr.mxu0 0.0
    %91 = vmatpush1.msra.mxu0 0.0
    %92 = vmatprep.subr.mxu0 0.0
    %93 = vmatpush1.msra.mxu0 0.0
    %94 = vmatprep.subr.mxu0 0.0
    %95 = vmatpush1.msra.mxu0 0.0
    %96 = vmatprep.subr.mxu0 0.0
    %97 = vmatpush1.msra.mxu0 0.0
    %98 = vmatprep.subr.mxu0 0.0
    %99 = vmatpush1.msra.mxu0 0.0
    %100 = vmatprep.subr.mxu0 0.0
    %101 = vmatpush1.msra.mxu0 0.0
    %102 = vmatprep.subr.mxu0 0.0
    %103 = vmatpush1.msra.mxu0 0.0
    %104 = vmatprep.subr.mxu0 0.0
    %105 = vmatpush1.msra.mxu0 0.0
    %106 = vmatprep.subr.mxu0 0.0
    %107 = vmatpush1.msra.mxu0 0.0
    %108 = vmatprep.subr.mxu0 0.0
    %109 = vmatpush1.msra.mxu0 0.0
    %110 = vmatprep.subr.mxu0 0.0
    %111 = vmatpush1.msra.mxu0 0.0
    %112 = vmatprep.subr.mxu0 0.0
    %113 = vmatpush1.msra.mxu0 0.0
    %114 = vmatprep.subr.mxu0 0.0
    %115 = vmatpush1.msra.mxu0 0.0
    %116 = vmatprep.subr.mxu0 0.0
    %117 = vmatpush1.msra.mxu0 0.0
    %118 = vmatprep.subr.mxu0 0.0
    %119 = vmatpush1.msra.mxu0 0.0
    %120 = vmatprep.subr.mxu0 0.0
    %121 = vmatpush1.msra.mxu0 0.0
    %122 = vmatprep.subr.mxu0 0.0
    %123 = vmatpush1.msra.mxu0 0.0
    %124 = vmatprep.subr.mxu0 0.0
    %125 = vmatpush1.msra.mxu0 0.0
    %126 = vmatprep.subr.mxu0 0.0
    %127 = vmatpush1.msra.mxu0 0.0
    %128 = vmatprep.subr.mxu0 0.0
    %129 = vmatpush1.msra.mxu0 0.0
    %130 = vmatprep.subr.mxu0 0.0
    %131 = vmatpush1.msra.mxu0 0.0
    %132 = vmatprep.subr.mxu0 0.0
    %133 = vmatpush1.msra.mxu0 0.0
    %134 = vmatprep.subr.mxu0 0.0
    %135 = vmatpush1.msra.mxu0 0.0
    %136 = vmatprep.subr.mxu0 0.0
    %137 = vmatpush1.msra.mxu0 0.0
    %138 = vmatprep.subr.mxu0 0.0
    %139 = vmatpush1.msra.mxu0 0.0
    %140 = vmatprep.subr.mxu0 0.0
    %141 = vmatpush1.msra.mxu0 0.0
    %142 = vmatprep.subr.mxu0 0.0
    %143 = vmatpush1.msra.mxu0 0.0
    %144 = vmatprep.mubr.f32.mxu0 0.0
    %145 = vmatmul.mubr.f32.gmra.mrb[0].mxu0 %v69
    %v146 = vpop.f32.mrb[0].mxu0
    %v147 = vadd.f32 0.0, %v146
    %v148 = vpop.f32.mrb[0].mxu0
    %149 = vmatprep.mubr.f32.mxu0 0.0
    %150 = vmatmul.mubr.f32.gmra.mrb[0].mxu0 %v72
    %v151 = vpop.f32.mrb[0].mxu0
    %v152 = vadd.f32 0.0, %v151
    %v153 = vpop.f32.mrb[0].mxu0
    %154 = vmatprep.mubr.f32.mxu0 0.0
    %155 = vmatmul.mubr.f32.gmra.mrb[0].mxu0 %v75
    %v156 = vpop.f32.mrb[0].mxu0
    %v157 = vadd.f32 0.0, %v156
    %v158 = vpop.f32.mrb[0].mxu0
    %159 = vmatprep.mubr.f32.mxu0 0.0
    %160 = vmatmul.mubr.f32.gmra.mrb[0].mxu0 %v78
    %v161 = vpop.f32.mrb[0].mxu0
    %v162 = vadd.f32 0.0, %v161
    %v163 = vpop.f32.mrb[0].mxu0
    %164 = vdwg.mxu0
    %v165 = vlaneseq
    %v166 = vand.u32 %v165, 127
    %v167 = vld [vmem:[%s5] sm:$0x3]
    %v168 = vld [vmem:[%s6] sm:$0x3]
    %v169 = vld [vmem:[%s0] sm:$0x3]
    %170 = vset.pattern.permute.xlu0 0
    %171 = vperm.xlu0 %170, %v169
    %v172 = vpop.permute.xlu0 %171
    %vm173 = vcmp.eq.s32.totalorder %v166, %v172
    %v174 = vsel %vm173, 1.0, 0.0
    %vm175 = vcmask 261120
    %v177 = vsel %vm175, %v167, 0
    %179 = vmatprep.subr.mxu0 0.0
    %180 = vmatpush1.msra.mxu0 %v57
    %181 = vmatprep.subr.mxu0 0.0
    %182 = vmatpush1.msra.mxu0 %v58
    %183 = vmatprep.subr.mxu0 0.0
    %184 = vmatpush1.msra.mxu0 %v59
    %185 = vmatprep.subr.mxu0 0.0
    %186 = vmatpush1.msra.mxu0 %v60
    %187 = vmatprep.subr.mxu0 0.0
    %188 = vmatpush1.msra.mxu0 0.0
    %189 = vmatprep.subr.mxu0 0.0
    %190 = vmatpush1.msra.mxu0 0.0
    %191 = vmatprep.subr.mxu0 0.0
    %192 = vmatpush1.msra.mxu0 0.0
    %193 = vmatprep.subr.mxu0 0.0
    %194 = vmatpush1.msra.mxu0 0.0
    %195 = vmatprep.subr.mxu0 0.0
    %196 = vmatpush1.msra.mxu0 0.0
    %197 = vmatprep.subr.mxu0 0.0
    %198 = vmatpush1.msra.mxu0 0.0
    %199 = vmatprep.subr.mxu0 0.0
    %200 = vmatpush1.msra.mxu0 0.0
    %201 = vmatprep.subr.mxu0 0.0
    %202 = vmatpush1.msra.mxu0 0.0
    %203 = vmatprep.subr.mxu0 0.0
    %204 = vmatpush1.msra.mxu0 0.0
    %205 = vmatprep.subr.mxu0 0.0
    %206 = vmatpush1.msra.mxu0 0.0
    %207 = vmatprep.subr.mxu0 0.0
    %208 = vmatpush1.msra.mxu0 0.0
    %209 = vmatprep.subr.mxu0 0.0
    %210 = vmatpush1.msra.mxu0 0.0
    %211 = vmatprep.subr.mxu0 0.0
    %212 = vmatpush1.msra.mxu0 0.0
    %213 = vmatprep.subr.mxu0 0.0
    %214 = vmatpush1.msra.mxu0 0.0
    %215 = vmatprep.subr.mxu0 0.0
    %216 = vmatpush1.msra.mxu0 0.0
    %217 = vmatprep.subr.mxu0 0.0
    %218 = vmatpush1.msra.mxu0 0.0
    %219 = vmatprep.subr.mxu0 0.0
    %220 = vmatpush1.msra.mxu0 0.0
    %221 = vmatprep.subr.mxu0 0.0
    %222 = vmatpush1.msra.mxu0 0.0
    %223 = vmatprep.subr.mxu0 0.0
    %224 = vmatpush1.msra.mxu0 0.0
    %225 = vmatprep.subr.mxu0 0.0
    %226 = vmatpush1.msra.mxu0 0.0
    %227 = vmatprep.subr.mxu0 0.0
    %228 = vmatpush1.msra.mxu0 0.0
    %229 = vmatprep.subr.mxu0 0.0
    %230 = vmatpush1.msra.mxu0 0.0
    %231 = vmatprep.subr.mxu0 0.0
    %232 = vmatpush1.msra.mxu0 0.0
    %233 = vmatprep.subr.mxu0 0.0
    %234 = vmatpush1.msra.mxu0 0.0
    %235 = vmatprep.subr.mxu0 0.0
    %236 = vmatpush1.msra.mxu0 0.0
    %237 = vmatprep.subr.mxu0 0.0
    %238 = vmatpush1.msra.mxu0 0.0
    %239 = vmatprep.subr.mxu0 0.0
    %240 = vmatpush1.msra.mxu0 0.0
    %241 = vmatprep.subr.mxu0 0.0
    %242 = vmatpush1.msra.mxu0 0.0
    %243 = vmatprep.mubr.f32.mxu0 0.0
    %244 = vmatmul.mubr.f32.gmra.mrb[0].mxu0 %v177
    %v245 = vpop.f32.mrb[0].mxu0
    %v246 = vadd.f32 0.0, %v245
    %v247 = vpop.f32.mrb[0].mxu0
    %248 = vdwg.mxu0
    %v250 = vsel %vm175, %v174, 0
    %252 = vmatprep.subr.mxu0 0.0
    %253 = vmatpush1.msra.mxu0 %v147
    %254 = vmatprep.subr.mxu0 0.0
    %255 = vmatpush1.msra.mxu0 %v152
    %256 = vmatprep.subr.mxu0 0.0
    %257 = vmatpush1.msra.mxu0 %v157
    %258 = vmatprep.subr.mxu0 0.0
    %259 = vmatpush1.msra.mxu0 %v162
    %260 = vmatprep.subr.mxu0 0.0
    %261 = vmatpush1.msra.mxu0 0.0
    %262 = vmatprep.subr.mxu0 0.0
    %263 = vmatpush1.msra.mxu0 0.0
    %264 = vmatprep.subr.mxu0 0.0
    %265 = vmatpush1.msra.mxu0 0.0
    %266 = vmatprep.subr.mxu0 0.0
    %267 = vmatpush1.msra.mxu0 0.0
    %268 = vmatprep.subr.mxu0 0.0
    %269 = vmatpush1.msra.mxu0 0.0
    %270 = vmatprep.subr.mxu0 0.0
    %271 = vmatpush1.msra.mxu0 0.0
    %272 = vmatprep.subr.mxu0 0.0
    %273 = vmatpush1.msra.mxu0 0.0
    %274 = vmatprep.subr.mxu0 0.0
    %275 = vmatpush1.msra.mxu0 0.0
    %276 = vmatprep.subr.mxu0 0.0
    %277 = vmatpush1.msra.mxu0 0.0
    %278 = vmatprep.subr.mxu0 0.0
    %279 = vmatpush1.msra.mxu0 0.0
    %280 = vmatprep.subr.mxu0 0.0
    %281 = vmatpush1.msra.mxu0 0.0
    %282 = vmatprep.subr.mxu0 0.0
    %283 = vmatpush1.msra.mxu0 0.0
    %284 = vmatprep.subr.mxu0 0.0
    %285 = vmatpush1.msra.mxu0 0.0
    %286 = vmatprep.subr.mxu0 0.0
    %287 = vmatpush1.msra.mxu0 0.0
    %288 = vmatprep.subr.mxu0 0.0
    %289 = vmatpush1.msra.mxu0 0.0
    %290 = vmatprep.subr.mxu0 0.0
    %291 = vmatpush1.msra.mxu0 0.0
    %292 = vmatprep.subr.mxu0 0.0
    %293 = vmatpush1.msra.mxu0 0.0
    %294 = vmatprep.subr.mxu0 0.0
    %295 = vmatpush1.msra.mxu0 0.0
    %296 = vmatprep.subr.mxu0 0.0
    %297 = vmatpush1.msra.mxu0 0.0
    %298 = vmatprep.subr.mxu0 0.0
    %299 = vmatpush1.msra.mxu0 0.0
    %300 = vmatprep.subr.mxu0 0.0
    %301 = vmatpush1.msra.mxu0 0.0
    %302 = vmatprep.subr.mxu0 0.0
    %303 = vmatpush1.msra.mxu0 0.0
    %304 = vmatprep.subr.mxu0 0.0
    %305 = vmatpush1.msra.mxu0 0.0
    %306 = vmatprep.subr.mxu0 0.0
    %307 = vmatpush1.msra.mxu0 0.0
    %308 = vmatprep.subr.mxu0 0.0
    %309 = vmatpush1.msra.mxu0 0.0
    %310 = vmatprep.subr.mxu0 0.0
    %311 = vmatpush1.msra.mxu0 0.0
    %312 = vmatprep.subr.mxu0 0.0
    %313 = vmatpush1.msra.mxu0 0.0
    %314 = vmatprep.subr.mxu0 0.0
    %315 = vmatpush1.msra.mxu0 0.0
    %316 = vmatprep.mubr.f32.mxu0 0.0
    %317 = vmatmul.mubr.f32.gmra.mrb[0].mxu0 %v250
    %v318 = vpop.f32.mrb[0].mxu0
    %v319 = vadd.f32 %v246, %v318
    %v320 = vpop.f32.mrb[0].mxu0
    %321 = vdwg.mxu0
    %v323 = vlaneseq
    %v324 = vshrl.u32 %v323, 7
    %v325 = vsub.s32 0, %v324
    %v326 = vrot.slane %v61, %v325
    %v328 = vadd.f32 %v319, %v326
    %v329 = vxor.u32 %v328, 2147483648
    %v330 = vmul.f32 %v329, 1.442695
    %v331 = vpow.pop %v330
    %v332 = vadd.f32 %v331, 1.0
    %v333 = vrcp.pop %v332
    %v334 = vmul.f32 1.0, %v333
    %v335 = vtanh.pop %v328
    %337 = vrot.lane.b32.xlu0 %v168, 32
    %v338 = vpop.permute.xlu0 %337
    %v340 = vmul.f32 %v334, %v338
    %342 = vrot.lane.b32.xlu0 %v335, 64
    %v343 = vpop.permute.xlu0 %342
    %v345 = vmul.f32 %v334, %v343
    %347 = vrot.lane.b32.xlu0 %v345, 32
    %v348 = vpop.permute.xlu0 %347
    %v350 = vadd.f32 %v340, %v348
    %v351 = vtanh.pop %v350
    %353 = vrot.lane.b32.xlu0 %v351, 64
    %v354 = vpop.permute.xlu0 %353
    %v356 = vmul.f32 %v334, %v354
    %v358 = vlaneseq
    %v359 = vshrl.u32 %v358, 7
    %v360 = vsub.s32 0, %v359
    %v361 = vrot.slane %v66, %v360
    %364 = vrot.lane.b32.xlu0 %v356, 32
    %v365 = vpop.permute.xlu0 %364
    %v366 = vsel %vm175, %v365, 0
    %368 = vmatprep.subr.mxu0 0.0
    %369 = vmatpush1.msra.mxu0 %v62
    %370 = vmatprep.subr.mxu0 0.0
    %371 = vmatpush1.msra.mxu0 %v63
    %372 = vmatprep.subr.mxu0 0.0
    %373 = vmatpush1.msra.mxu0 %v64
    %374 = vmatprep.subr.mxu0 0.0
    %375 = vmatpush1.msra.mxu0 %v65
    %376 = vmatprep.subr.mxu0 0.0
    %377 = vmatpush1.msra.mxu0 0.0
    %378 = vmatprep.subr.mxu0 0.0
    %379 = vmatpush1.msra.mxu0 0.0
    %380 = vmatprep.subr.mxu0 0.0
    %381 = vmatpush1.msra.mxu0 0.0
    %382 = vmatprep.subr.mxu0 0.0
    %383 = vmatpush1.msra.mxu0 0.0
    %384 = vmatprep.subr.mxu0 0.0
    %385 = vmatpush1.msra.mxu0 0.0
    %386 = vmatprep.subr.mxu0 0.0
    %387 = vmatpush1.msra.mxu0 0.0
    %388 = vmatprep.subr.mxu0 0.0
    %389 = vmatpush1.msra.mxu0 0.0
    %390 = vmatprep.subr.mxu0 0.0
    %391 = vmatpush1.msra.mxu0 0.0
    %392 = vmatprep.subr.mxu0 0.0
    %393 = vmatpush1.msra.mxu0 0.0
    %394 = vmatprep.subr.mxu0 0.0
    %395 = vmatpush1.msra.mxu0 0.0
    %396 = vmatprep.subr.mxu0 0.0
    %397 = vmatpush1.msra.mxu0 0.0
    %398 = vmatprep.subr.mxu0 0.0
    %399 = vmatpush1.msra.mxu0 0.0
    %400 = vmatprep.subr.mxu0 0.0
    %401 = vmatpush1.msra.mxu0 0.0
    %402 = vmatprep.subr.mxu0 0.0
    %403 = vmatpush1.msra.mxu0 0.0
    %404 = vmatprep.subr.mxu0 0.0
    %405 = vmatpush1.msra.mxu0 0.0
    %406 = vmatprep.subr.mxu0 0.0
    %407 = vmatpush1.msra.mxu0 0.0
    %408 = vmatprep.subr.mxu0 0.0
    %409 = vmatpush1.msra.mxu0 0.0
    %410 = vmatprep.subr.mxu0 0.0
    %411 = vmatpush1.msra.mxu0 0.0
    %412 = vmatprep.subr.mxu0 0.0
    %413 = vmatpush1.msra.mxu0 0.0
    %414 = vmatprep.subr.mxu0 0.0
    %415 = vmatpush1.msra.mxu0 0.0
    %416 = vmatprep.subr.mxu0 0.0
    %417 = vmatpush1.msra.mxu0 0.0
    %418 = vmatprep.subr.mxu0 0.0
    %419 = vmatpush1.msra.mxu0 0.0
    %420 = vmatprep.subr.mxu0 0.0
    %421 = vmatpush1.msra.mxu0 0.0
    %422 = vmatprep.subr.mxu0 0.0
    %423 = vmatpush1.msra.mxu0 0.0
    %424 = vmatprep.subr.mxu0 0.0
    %425 = vmatpush1.msra.mxu0 0.0
    %426 = vmatprep.subr.mxu0 0.0
    %427 = vmatpush1.msra.mxu0 0.0
    %428 = vmatprep.subr.mxu0 0.0
    %429 = vmatpush1.msra.mxu0 0.0
    %430 = vmatprep.subr.mxu0 0.0
    %431 = vmatpush1.msra.mxu0 0.0
    %432 = vmatprep.mubr.f32.mxu0 0.0
    %433 = vmatmul.mubr.f32.gmra.mrb[0].mxu0 %v366
    %v434 = vpop.f32.mrb[0].mxu0
    %v435 = vadd.f32 %v361, %v434
    %v436 = vpop.f32.mrb[0].mxu0
    %437 = vdwg.mxu0
    %vm438 = vcmask 254976
    %439 = vst.msk [vmem:[#allocation5] sm:$0x3] %vm438, %v435
    %s440 = scalar_lea.vmem %s0, 2
    %v441 = vld [vmem:[%s440] sm:$0x3]
    %442 = vset.pattern.permute.xlu0 0
    %443 = vperm.xlu0 %442, %v441
    %v444 = vpop.permute.xlu0 %443
    %vm445 = vcmp.eq.s32.totalorder %v166, %v444
    %v446 = vsel %vm445, 1.0, 0.0
    %447 = vmatprep.subr.mxu0 0.0
    %448 = vmatpush1.msra.mxu0 %v57
    %449 = vmatprep.subr.mxu0 0.0
    %450 = vmatpush1.msra.mxu0 %v58
    %451 = vmatprep.subr.mxu0 0.0
    %452 = vmatpush1.msra.mxu0 %v59
    %453 = vmatprep.subr.mxu0 0.0
    %454 = vmatpush1.msra.mxu0 %v60
    %455 = vmatprep.subr.mxu0 0.0
    %456 = vmatpush1.msra.mxu0 0.0
    %457 = vmatprep.subr.mxu0 0.0
    %458 = vmatpush1.msra.mxu0 0.0
    %459 = vmatprep.subr.mxu0 0.0
    %460 = vmatpush1.msra.mxu0 0.0
    %461 = vmatprep.subr.mxu0 0.0
    %462 = vmatpush1.msra.mxu0 0.0
    %463 = vmatprep.subr.mxu0 0.0
    %464 = vmatpush1.msra.mxu0 0.0
    %465 = vmatprep.subr.mxu0 0.0
    %466 = vmatpush1.msra.mxu0 0.0
    %467 = vmatprep.subr.mxu0 0.0
    %468 = vmatpush1.msra.mxu0 0.0
    %469 = vmatprep.subr.mxu0 0.0
    %470 = vmatpush1.msra.mxu0 0.0
    %471 = vmatprep.subr.mxu0 0.0
    %472 = vmatpush1.msra.mxu0 0.0
    %473 = vmatprep.subr.mxu0 0.0
    %474 = vmatpush1.msra.mxu0 0.0
    %475 = vmatprep.subr.mxu0 0.0
    %476 = vmatpush1.msra.mxu0 0.0
    %477 = vmatprep.subr.mxu0 0.0
    %478 = vmatpush1.msra.mxu0 0.0
    %479 = vmatprep.subr.mxu0 0.0
    %480 = vmatpush1.msra.mxu0 0.0
    %481 = vmatprep.subr.mxu0 0.0
    %482 = vmatpush1.msra.mxu0 0.0
    %483 = vmatprep.subr.mxu0 0.0
    %484 = vmatpush1.msra.mxu0 0.0
    %485 = vmatprep.subr.mxu0 0.0
    %486 = vmatpush1.msra.mxu0 0.0
    %487 = vmatprep.subr.mxu0 0.0
    %488 = vmatpush1.msra.mxu0 0.0
    %489 = vmatprep.subr.mxu0 0.0
    %490 = vmatpush1.msra.mxu0 0.0
    %491 = vmatprep.subr.mxu0 0.0
    %492 = vmatpush1.msra.mxu0 0.0
    %493 = vmatprep.subr.mxu0 0.0
    %494 = vmatpush1.msra.mxu0 0.0
    %495 = vmatprep.subr.mxu0 0.0
    %496 = vmatpush1.msra.mxu0 0.0
    %497 = vmatprep.subr.mxu0 0.0
    %498 = vmatpush1.msra.mxu0 0.0
    %499 = vmatprep.subr.mxu0 0.0
    %500 = vmatpush1.msra.mxu0 0.0
    %501 = vmatprep.subr.mxu0 0.0
    %502 = vmatpush1.msra.mxu0 0.0
    %503 = vmatprep.subr.mxu0 0.0
    %504 = vmatpush1.msra.mxu0 0.0
    %505 = vmatprep.subr.mxu0 0.0
    %506 = vmatpush1.msra.mxu0 0.0
    %507 = vmatprep.subr.mxu0 0.0
    %508 = vmatpush1.msra.mxu0 0.0
    %509 = vmatprep.subr.mxu0 0.0
    %510 = vmatpush1.msra.mxu0 0.0
    %511 = vmatprep.mubr.f32.mxu0 0.0
    %512 = vmatmul.mubr.f32.gmra.mrb[0].mxu0 %v366
    %v513 = vpop.f32.mrb[0].mxu0
    %v514 = vadd.f32 0.0, %v513
    %v515 = vpop.f32.mrb[0].mxu0
    %516 = vdwg.mxu0
    %v518 = vsel %vm175, %v446, 0
    %520 = vmatprep.subr.mxu0 0.0
    %521 = vmatpush1.msra.mxu0 %v147
    %522 = vmatprep.subr.mxu0 0.0
    %523 = vmatpush1.msra.mxu0 %v152
    %524 = vmatprep.subr.mxu0 0.0
    %525 = vmatpush1.msra.mxu0 %v157
    %526 = vmatprep.subr.mxu0 0.0
    %527 = vmatpush1.msra.mxu0 %v162
    %528 = vmatprep.subr.mxu0 0.0
    %529 = vmatpush1.msra.mxu0 0.0
    %530 = vmatprep.subr.mxu0 0.0
    %531 = vmatpush1.msra.mxu0 0.0
    %532 = vmatprep.subr.mxu0 0.0
    %533 = vmatpush1.msra.mxu0 0.0
    %534 = vmatprep.subr.mxu0 0.0
    %535 = vmatpush1.msra.mxu0 0.0
    %536 = vmatprep.subr.mxu0 0.0
    %537 = vmatpush1.msra.mxu0 0.0
    %538 = vmatprep.subr.mxu0 0.0
    %539 = vmatpush1.msra.mxu0 0.0
    %540 = vmatprep.subr.mxu0 0.0
    %541 = vmatpush1.msra.mxu0 0.0
    %542 = vmatprep.subr.mxu0 0.0
    %543 = vmatpush1.msra.mxu0 0.0
    %544 = vmatprep.subr.mxu0 0.0
    %545 = vmatpush1.msra.mxu0 0.0
    %546 = vmatprep.subr.mxu0 0.0
    %547 = vmatpush1.msra.mxu0 0.0
    %548 = vmatprep.subr.mxu0 0.0
    %549 = vmatpush1.msra.mxu0 0.0
    %550 = vmatprep.subr.mxu0 0.0
    %551 = vmatpush1.msra.mxu0 0.0
    %552 = vmatprep.subr.mxu0 0.0
    %553 = vmatpush1.msra.mxu0 0.0
    %554 = vmatprep.subr.mxu0 0.0
    %555 = vmatpush1.msra.mxu0 0.0
    %556 = vmatprep.subr.mxu0 0.0
    %557 = vmatpush1.msra.mxu0 0.0
    %558 = vmatprep.subr.mxu0 0.0
    %559 = vmatpush1.msra.mxu0 0.0
    %560 = vmatprep.subr.mxu0 0.0
    %561 = vmatpush1.msra.mxu0 0.0
    %562 = vmatprep.subr.mxu0 0.0
    %563 = vmatpush1.msra.mxu0 0.0
    %564 = vmatprep.subr.mxu0 0.0
    %565 = vmatpush1.msra.mxu0 0.0
    %566 = vmatprep.subr.mxu0 0.0
    %567 = vmatpush1.msra.mxu0 0.0
    %568 = vmatprep.subr.mxu0 0.0
    %569 = vmatpush1.msra.mxu0 0.0
    %570 = vmatprep.subr.mxu0 0.0
    %571 = vmatpush1.msra.mxu0 0.0
    %572 = vmatprep.subr.mxu0 0.0
    %573 = vmatpush1.msra.mxu0 0.0
    %574 = vmatprep.subr.mxu0 0.0
    %575 = vmatpush1.msra.mxu0 0.0
    %576 = vmatprep.subr.mxu0 0.0
    %577 = vmatpush1.msra.mxu0 0.0
    %578 = vmatprep.subr.mxu0 0.0
    %579 = vmatpush1.msra.mxu0 0.0
    %580 = vmatprep.subr.mxu0 0.0
    %581 = vmatpush1.msra.mxu0 0.0
    %582 = vmatprep.subr.mxu0 0.0
    %583 = vmatpush1.msra.mxu0 0.0
    %584 = vmatprep.mubr.f32.mxu0 0.0
    %585 = vmatmul.mubr.f32.gmra.mrb[0].mxu0 %v518
    %v586 = vpop.f32.mrb[0].mxu0
    %v587 = vadd.f32 %v514, %v586
    %v588 = vpop.f32.mrb[0].mxu0
    %589 = vdwg.mxu0
    %v590 = vadd.f32 %v587, %v326
    %v591 = vxor.u32 %v590, 2147483648
    %v592 = vmul.f32 %v591, 1.442695
    %v593 = vpow.pop %v592
    %v594 = vadd.f32 %v593, 1.0
    %v595 = vrcp.pop %v594
    %v596 = vmul.f32 1.0, %v595
    %v597 = vtanh.pop %v590
    %v598 = vmul.f32 %v596, %v350
    %600 = vrot.lane.b32.xlu0 %v597, 64
    %v601 = vpop.permute.xlu0 %600
    %v603 = vmul.f32 %v596, %v601
    %605 = vrot.lane.b32.xlu0 %v603, 32
    %v606 = vpop.permute.xlu0 %605
    %v608 = vadd.f32 %v598, %v606
    %v609 = vtanh.pop %v608
    %611 = vrot.lane.b32.xlu0 %v609, 64
    %v612 = vpop.permute.xlu0 %611
    %v614 = vmul.f32 %v596, %v612
    %616 = vrot.lane.b32.xlu0 %v614, 32
    %v617 = vpop.permute.xlu0 %616
    %v618 = vsel %vm175, %v617, 0
    %620 = vmatprep.subr.mxu0 0.0
    %621 = vmatpush1.msra.mxu0 %v62
    %622 = vmatprep.subr.mxu0 0.0
    %623 = vmatpush1.msra.mxu0 %v63
    %624 = vmatprep.subr.mxu0 0.0
    %625 = vmatpush1.msra.mxu0 %v64
    %626 = vmatprep.subr.mxu0 0.0
    %627 = vmatpush1.msra.mxu0 %v65
    %628 = vmatprep.subr.mxu0 0.0
    %629 = vmatpush1.msra.mxu0 0.0
    %630 = vmatprep.subr.mxu0 0.0
    %631 = vmatpush1.msra.mxu0 0.0
    %632 = vmatprep.subr.mxu0 0.0
    %633 = vmatpush1.msra.mxu0 0.0
    %634 = vmatprep.subr.mxu0 0.0
    %635 = vmatpush1.msra.mxu0 0.0
    %636 = vmatprep.subr.mxu0 0.0
    %637 = vmatpush1.msra.mxu0 0.0
    %638 = vmatprep.subr.mxu0 0.0
    %639 = vmatpush1.msra.mxu0 0.0
    %640 = vmatprep.subr.mxu0 0.0
    %641 = vmatpush1.msra.mxu0 0.0
    %642 = vmatprep.subr.mxu0 0.0
    %643 = vmatpush1.msra.mxu0 0.0
    %644 = vmatprep.subr.mxu0 0.0
    %645 = vmatpush1.msra.mxu0 0.0
    %646 = vmatprep.subr.mxu0 0.0
    %647 = vmatpush1.msra.mxu0 0.0
    %648 = vmatprep.subr.mxu0 0.0
    %649 = vmatpush1.msra.mxu0 0.0
    %650 = vmatprep.subr.mxu0 0.0
    %651 = vmatpush1.msra.mxu0 0.0
    %652 = vmatprep.subr.mxu0 0.0
    %653 = vmatpush1.msra.mxu0 0.0
    %654 = vmatprep.subr.mxu0 0.0
    %655 = vmatpush1.msra.mxu0 0.0
    %656 = vmatprep.subr.mxu0 0.0
    %657 = vmatpush1.msra.mxu0 0.0
    %658 = vmatprep.subr.mxu0 0.0
    %659 = vmatpush1.msra.mxu0 0.0
    %660 = vmatprep.subr.mxu0 0.0
    %661 = vmatpush1.msra.mxu0 0.0
    %662 = vmatprep.subr.mxu0 0.0
    %663 = vmatpush1.msra.mxu0 0.0
    %664 = vmatprep.subr.mxu0 0.0
    %665 = vmatpush1.msra.mxu0 0.0
    %666 = vmatprep.subr.mxu0 0.0
    %667 = vmatpush1.msra.mxu0 0.0
    %668 = vmatprep.subr.mxu0 0.0
    %669 = vmatpush1.msra.mxu0 0.0
    %670 = vmatprep.subr.mxu0 0.0
    %671 = vmatpush1.msra.mxu0 0.0
    %672 = vmatprep.subr.mxu0 0.0
    %673 = vmatpush1.msra.mxu0 0.0
    %674 = vmatprep.subr.mxu0 0.0
    %675 = vmatpush1.msra.mxu0 0.0
    %676 = vmatprep.subr.mxu0 0.0
    %677 = vmatpush1.msra.mxu0 0.0
    %678 = vmatprep.subr.mxu0 0.0
    %679 = vmatpush1.msra.mxu0 0.0
    %680 = vmatprep.subr.mxu0 0.0
    %681 = vmatpush1.msra.mxu0 0.0
    %682 = vmatprep.subr.mxu0 0.0
    %683 = vmatpush1.msra.mxu0 0.0
    %684 = vmatprep.mubr.f32.mxu0 0.0
    %685 = vmatmul.mubr.f32.gmra.mrb[0].mxu0 %v618
    %v686 = vpop.f32.mrb[0].mxu0
    %v687 = vadd.f32 %v361, %v686
    %v688 = vpop.f32.mrb[0].mxu0
    %689 = vdwg.mxu0
    %s690 = scalar_lea.vmem [#allocation5], 2
    %691 = vst.msk [vmem:[%s690] sm:$0x3] %vm438, %v687
    %s692 = scalar_lea.vmem %s0, 4
    %v693 = vld [vmem:[%s692] sm:$0x3]
    %694 = vset.pattern.permute.xlu0 0
    %695 = vperm.xlu0 %694, %v693
    %v696 = vpop.permute.xlu0 %695
    %vm697 = vcmp.eq.s32.totalorder %v166, %v696
    %v698 = vsel %vm697, 1.0, 0.0
    %699 = vmatprep.subr.mxu0 0.0
    %700 = vmatpush1.msra.mxu0 %v57
    %701 = vmatprep.subr.mxu0 0.0
    %702 = vmatpush1.msra.mxu0 %v58
    %703 = vmatprep.subr.mxu0 0.0
    %704 = vmatpush1.msra.mxu0 %v59
    %705 = vmatprep.subr.mxu0 0.0
    %706 = vmatpush1.msra.mxu0 %v60
    %707 = vmatprep.subr.mxu0 0.0
    %708 = vmatpush1.msra.mxu0 0.0
    %709 = vmatprep.subr.mxu0 0.0
    %710 = vmatpush1.msra.mxu0 0.0
    %711 = vmatprep.subr.mxu0 0.0
    %712 = vmatpush1.msra.mxu0 0.0
    %713 = vmatprep.subr.mxu0 0.0
    %714 = vmatpush1.msra.mxu0 0.0
    %715 = vmatprep.subr.mxu0 0.0
    %716 = vmatpush1.msra.mxu0 0.0
    %717 = vmatprep.subr.mxu0 0.0
    %718 = vmatpush1.msra.mxu0 0.0
    %719 = vmatprep.subr.mxu0 0.0
    %720 = vmatpush1.msra.mxu0 0.0
    %721 = vmatprep.subr.mxu0 0.0
    %722 = vmatpush1.msra.mxu0 0.0
    %723 = vmatprep.subr.mxu0 0.0
    %724 = vmatpush1.msra.mxu0 0.0
    %725 = vmatprep.subr.mxu0 0.0
    %726 = vmatpush1.msra.mxu0 0.0
    %727 = vmatprep.subr.mxu0 0.0
    %728 = vmatpush1.msra.mxu0 0.0
    %729 = vmatprep.subr.mxu0 0.0
    %730 = vmatpush1.msra.mxu0 0.0
    %731 = vmatprep.subr.mxu0 0.0
    %732 = vmatpush1.msra.mxu0 0.0
    %733 = vmatprep.subr.mxu0 0.0
    %734 = vmatpush1.msra.mxu0 0.0
    %735 = vmatprep.subr.mxu0 0.0
    %736 = vmatpush1.msra.mxu0 0.0
    %737 = vmatprep.subr.mxu0 0.0
    %738 = vmatpush1.msra.mxu0 0.0
    %739 = vmatprep.subr.mxu0 0.0
    %740 = vmatpush1.msra.mxu0 0.0
    %741 = vmatprep.subr.mxu0 0.0
    %742 = vmatpush1.msra.mxu0 0.0
    %743 = vmatprep.subr.mxu0 0.0
    %744 = vmatpush1.msra.mxu0 0.0
    %745 = vmatprep.subr.mxu0 0.0
    %746 = vmatpush1.msra.mxu0 0.0
    %747 = vmatprep.subr.mxu0 0.0
    %748 = vmatpush1.msra.mxu0 0.0
    %749 = vmatprep.subr.mxu0 0.0
    %750 = vmatpush1.msra.mxu0 0.0
    %751 = vmatprep.subr.mxu0 0.0
    %752 = vmatpush1.msra.mxu0 0.0
    %753 = vmatprep.subr.mxu0 0.0
    %754 = vmatpush1.msra.mxu0 0.0
    %755 = vmatprep.subr.mxu0 0.0
    %756 = vmatpush1.msra.mxu0 0.0
    %757 = vmatprep.subr.mxu0 0.0
    %758 = vmatpush1.msra.mxu0 0.0
    %759 = vmatprep.subr.mxu0 0.0
    %760 = vmatpush1.msra.mxu0 0.0
    %761 = vmatprep.subr.mxu0 0.0
    %762 = vmatpush1.msra.mxu0 0.0
    %763 = vmatprep.mubr.f32.mxu0 0.0
    %764 = vmatmul.mubr.f32.gmra.mrb[0].mxu0 %v618
    %v765 = vpop.f32.mrb[0].mxu0
    %v766 = vadd.f32 0.0, %v765
    %v767 = vpop.f32.mrb[0].mxu0
    %768 = vdwg.mxu0
    %v770 = vsel %vm175, %v698, 0
    %772 = vmatprep.subr.mxu0 0.0
    %773 = vmatpush1.msra.mxu0 %v147
    %774 = vmatprep.subr.mxu0 0.0
    %775 = vmatpush1.msra.mxu0 %v152
    %776 = vmatprep.subr.mxu0 0.0
    %777 = vmatpush1.msra.mxu0 %v157
    %778 = vmatprep.subr.mxu0 0.0
    %779 = vmatpush1.msra.mxu0 %v162
    %780 = vmatprep.subr.mxu0 0.0
    %781 = vmatpush1.msra.mxu0 0.0
    %782 = vmatprep.subr.mxu0 0.0
    %783 = vmatpush1.msra.mxu0 0.0
    %784 = vmatprep.subr.mxu0 0.0
    %785 = vmatpush1.msra.mxu0 0.0
    %786 = vmatprep.subr.mxu0 0.0
    %787 = vmatpush1.msra.mxu0 0.0
    %788 = vmatprep.subr.mxu0 0.0
    %789 = vmatpush1.msra.mxu0 0.0
    %790 = vmatprep.subr.mxu0 0.0
    %791 = vmatpush1.msra.mxu0 0.0
    %792 = vmatprep.subr.mxu0 0.0
    %793 = vmatpush1.msra.mxu0 0.0
    %794 = vmatprep.subr.mxu0 0.0
    %795 = vmatpush1.msra.mxu0 0.0
    %796 = vmatprep.subr.mxu0 0.0
    %797 = vmatpush1.msra.mxu0 0.0
    %798 = vmatprep.subr.mxu0 0.0
    %799 = vmatpush1.msra.mxu0 0.0
    %800 = vmatprep.subr.mxu0 0.0
    %801 = vmatpush1.msra.mxu0 0.0
    %802 = vmatprep.subr.mxu0 0.0
    %803 = vmatpush1.msra.mxu0 0.0
    %804 = vmatprep.subr.mxu0 0.0
    %805 = vmatpush1.msra.mxu0 0.0
    %806 = vmatprep.subr.mxu0 0.0
    %807 = vmatpush1.msra.mxu0 0.0
    %808 = vmatprep.subr.mxu0 0.0
    %809 = vmatpush1.msra.mxu0 0.0
    %810 = vmatprep.subr.mxu0 0.0
    %811 = vmatpush1.msra.mxu0 0.0
    %812 = vmatprep.subr.mxu0 0.0
    %813 = vmatpush1.msra.mxu0 0.0
    %814 = vmatprep.subr.mxu0 0.0
    %815 = vmatpush1.msra.mxu0 0.0
    %816 = vmatprep.subr.mxu0 0.0
    %817 = vmatpush1.msra.mxu0 0.0
    %818 = vmatprep.subr.mxu0 0.0
    %819 = vmatpush1.msra.mxu0 0.0
    %820 = vmatprep.subr.mxu0 0.0
    %821 = vmatpush1.msra.mxu0 0.0
    %822 = vmatprep.subr.mxu0 0.0
    %823 = vmatpush1.msra.mxu0 0.0
    %824 = vmatprep.subr.mxu0 0.0
    %825 = vmatpush1.msra.mxu0 0.0
    %826 = vmatprep.subr.mxu0 0.0
    %827 = vmatpush1.msra.mxu0 0.0
    %828 = vmatprep.subr.mxu0 0.0
    %829 = vmatpush1.msra.mxu0 0.0
    %830 = vmatprep.subr.mxu0 0.0
    %831 = vmatpush1.msra.mxu0 0.0
    %832 = vmatprep.subr.mxu0 0.0
    %833 = vmatpush1.msra.mxu0 0.0
    %834 = vmatprep.subr.mxu0 0.0
    %835 = vmatpush1.msra.mxu0 0.0
    %836 = vmatprep.mubr.f32.mxu0 0.0
    %837 = vmatmul.mubr.f32.gmra.mrb[0].mxu0 %v770
    %v838 = vpop.f32.mrb[0].mxu0
    %v839 = vadd.f32 %v766, %v838
    %v840 = vpop.f32.mrb[0].mxu0
    %841 = vdwg.mxu0
    %v842 = vadd.f32 %v839, %v326
    %v843 = vxor.u32 %v842, 2147483648
    %v844 = vmul.f32 %v843, 1.442695
    %v845 = vpow.pop %v844
    %v846 = vadd.f32 %v845, 1.0
    %v847 = vrcp.pop %v846
    %v848 = vmul.f32 1.0, %v847
    %v849 = vtanh.pop %v842
    %v850 = vmul.f32 %v848, %v608
    %852 = vrot.lane.b32.xlu0 %v849, 64
    %v853 = vpop.permute.xlu0 %852
    %v855 = vmul.f32 %v848, %v853
    %857 = vrot.lane.b32.xlu0 %v855, 32
    %v858 = vpop.permute.xlu0 %857
    %v860 = vadd.f32 %v850, %v858
    %v861 = vtanh.pop %v860
    %863 = vrot.lane.b32.xlu0 %v861, 64
    %v864 = vpop.permute.xlu0 %863
    %v866 = vmul.f32 %v848, %v864
    %868 = vrot.lane.b32.xlu0 %v866, 32
    %v869 = vpop.permute.xlu0 %868
    %v870 = vsel %vm175, %v869, 0
    %872 = vmatprep.subr.mxu0 0.0
    %873 = vmatpush1.msra.mxu0 %v62
    %874 = vmatprep.subr.mxu0 0.0
    %875 = vmatpush1.msra.mxu0 %v63
    %876 = vmatprep.subr.mxu0 0.0
    %877 = vmatpush1.msra.mxu0 %v64
    %878 = vmatprep.subr.mxu0 0.0
    %879 = vmatpush1.msra.mxu0 %v65
    %880 = vmatprep.subr.mxu0 0.0
    %881 = vmatpush1.msra.mxu0 0.0
    %882 = vmatprep.subr.mxu0 0.0
    %883 = vmatpush1.msra.mxu0 0.0
    %884 = vmatprep.subr.mxu0 0.0
    %885 = vmatpush1.msra.mxu0 0.0
    %886 = vmatprep.subr.mxu0 0.0
    %887 = vmatpush1.msra.mxu0 0.0
    %888 = vmatprep.subr.mxu0 0.0
    %889 = vmatpush1.msra.mxu0 0.0
    %890 = vmatprep.subr.mxu0 0.0
    %891 = vmatpush1.msra.mxu0 0.0
    %892 = vmatprep.subr.mxu0 0.0
    %893 = vmatpush1.msra.mxu0 0.0
    %894 = vmatprep.subr.mxu0 0.0
    %895 = vmatpush1.msra.mxu0 0.0
    %896 = vmatprep.subr.mxu0 0.0
    %897 = vmatpush1.msra.mxu0 0.0
    %898 = vmatprep.subr.mxu0 0.0
    %899 = vmatpush1.msra.mxu0 0.0
    %900 = vmatprep.subr.mxu0 0.0
    %901 = vmatpush1.msra.mxu0 0.0
    %902 = vmatprep.subr.mxu0 0.0
    %903 = vmatpush1.msra.mxu0 0.0
    %904 = vmatprep.subr.mxu0 0.0
    %905 = vmatpush1.msra.mxu0 0.0
    %906 = vmatprep.subr.mxu0 0.0
    %907 = vmatpush1.msra.mxu0 0.0
    %908 = vmatprep.subr.mxu0 0.0
    %909 = vmatpush1.msra.mxu0 0.0
    %910 = vmatprep.subr.mxu0 0.0
    %911 = vmatpush1.msra.mxu0 0.0
    %912 = vmatprep.subr.mxu0 0.0
    %913 = vmatpush1.msra.mxu0 0.0
    %914 = vmatprep.subr.mxu0 0.0
    %915 = vmatpush1.msra.mxu0 0.0
    %916 = vmatprep.subr.mxu0 0.0
    %917 = vmatpush1.msra.mxu0 0.0
    %918 = vmatprep.subr.mxu0 0.0
    %919 = vmatpush1.msra.mxu0 0.0
    %920 = vmatprep.subr.mxu0 0.0
    %921 = vmatpush1.msra.mxu0 0.0
    %922 = vmatprep.subr.mxu0 0.0
    %923 = vmatpush1.msra.mxu0 0.0
    %924 = vmatprep.subr.mxu0 0.0
    %925 = vmatpush1.msra.mxu0 0.0
    %926 = vmatprep.subr.mxu0 0.0
    %927 = vmatpush1.msra.mxu0 0.0
    %928 = vmatprep.subr.mxu0 0.0
    %929 = vmatpush1.msra.mxu0 0.0
    %930 = vmatprep.subr.mxu0 0.0
    %931 = vmatpush1.msra.mxu0 0.0
    %932 = vmatprep.subr.mxu0 0.0
    %933 = vmatpush1.msra.mxu0 0.0
    %934 = vmatprep.subr.mxu0 0.0
    %935 = vmatpush1.msra.mxu0 0.0
    %936 = vmatprep.mubr.f32.mxu0 0.0
    %937 = vmatmul.mubr.f32.gmra.mrb[0].mxu0 %v870
    %v938 = vpop.f32.mrb[0].mxu0
    %v939 = vadd.f32 %v361, %v938
    %v940 = vpop.f32.mrb[0].mxu0
    %941 = vdwg.mxu0
    %s942 = scalar_lea.vmem [#allocation5], 4
    %943 = vst.msk [vmem:[%s942] sm:$0x3] %vm438, %v939
    %s944 = scalar_lea.vmem %s0, 6
    %v945 = vld [vmem:[%s944] sm:$0x3]
    %946 = vset.pattern.permute.xlu0 0
    %947 = vperm.xlu0 %946, %v945
    %v948 = vpop.permute.xlu0 %947
    %vm949 = vcmp.eq.s32.totalorder %v166, %v948
    %v950 = vsel %vm949, 1.0, 0.0
    %951 = vmatprep.subr.mxu0 0.0
    %952 = vmatpush1.msra.mxu0 %v57
    %953 = vmatprep.subr.mxu0 0.0
    %954 = vmatpush1.msra.mxu0 %v58
    %955 = vmatprep.subr.mxu0 0.0
    %956 = vmatpush1.msra.mxu0 %v59
    %957 = vmatprep.subr.mxu0 0.0
    %958 = vmatpush1.msra.mxu0 %v60
    %959 = vmatprep.subr.mxu0 0.0
    %960 = vmatpush1.msra.mxu0 0.0
    %961 = vmatprep.subr.mxu0 0.0
    %962 = vmatpush1.msra.mxu0 0.0
    %963 = vmatprep.subr.mxu0 0.0
    %964 = vmatpush1.msra.mxu0 0.0
    %965 = vmatprep.subr.mxu0 0.0
    %966 = vmatpush1.msra.mxu0 0.0
    %967 = vmatprep.subr.mxu0 0.0
    %968 = vmatpush1.msra.mxu0 0.0
    %969 = vmatprep.subr.mxu0 0.0
    %970 = vmatpush1.msra.mxu0 0.0
    %971 = vmatprep.subr.mxu0 0.0
    %972 = vmatpush1.msra.mxu0 0.0
    %973 = vmatprep.subr.mxu0 0.0
    %974 = vmatpush1.msra.mxu0 0.0
    %975 = vmatprep.subr.mxu0 0.0
    %976 = vmatpush1.msra.mxu0 0.0
    %977 = vmatprep.subr.mxu0 0.0
    %978 = vmatpush1.msra.mxu0 0.0
    %979 = vmatprep.subr.mxu0 0.0
    %980 = vmatpush1.msra.mxu0 0.0
    %981 = vmatprep.subr.mxu0 0.0
    %982 = vmatpush1.msra.mxu0 0.0
    %983 = vmatprep.subr.mxu0 0.0
    %984 = vmatpush1.msra.mxu0 0.0
    %985 = vmatprep.subr.mxu0 0.0
    %986 = vmatpush1.msra.mxu0 0.0
    %987 = vmatprep.subr.mxu0 0.0
    %988 = vmatpush1.msra.mxu0 0.0
    %989 = vmatprep.subr.mxu0 0.0
    %990 = vmatpush1.msra.mxu0 0.0
    %991 = vmatprep.subr.mxu0 0.0
    %992 = vmatpush1.msra.mxu0 0.0
    %993 = vmatprep.subr.mxu0 0.0
    %994 = vmatpush1.msra.mxu0 0.0
    %995 = vmatprep.subr.mxu0 0.0
    %996 = vmatpush1.msra.mxu0 0.0
    %997 = vmatprep.subr.mxu0 0.0
    %998 = vmatpush1.msra.mxu0 0.0
    %999 = vmatprep.subr.mxu0 0.0
    %1000 = vmatpush1.msra.mxu0 0.0
    %1001 = vmatprep.subr.mxu0 0.0
    %1002 = vmatpush1.msra.mxu0 0.0
    %1003 = vmatprep.subr.mxu0 0.0
    %1004 = vmatpush1.msra.mxu0 0.0
    %1005 = vmatprep.subr.mxu0 0.0
    %1006 = vmatpush1.msra.mxu0 0.0
    %1007 = vmatprep.subr.mxu0 0.0
    %1008 = vmatpush1.msra.mxu0 0.0
    %1009 = vmatprep.subr.mxu0 0.0
    %1010 = vmatpush1.msra.mxu0 0.0
    %1011 = vmatprep.subr.mxu0 0.0
    %1012 = vmatpush1.msra.mxu0 0.0
    %1013 = vmatprep.subr.mxu0 0.0
    %1014 = vmatpush1.msra.mxu0 0.0
    %1015 = vmatprep.mubr.f32.mxu0 0.0
    %1016 = vmatmul.mubr.f32.gmra.mrb[0].mxu0 %v870
    %v1017 = vpop.f32.mrb[0].mxu0
    %v1018 = vadd.f32 0.0, %v1017
    %v1019 = vpop.f32.mrb[0].mxu0
    %1020 = vdwg.mxu0
    %v1022 = vsel %vm175, %v950, 0
    %1024 = vmatprep.subr.mxu0 0.0
    %1025 = vmatpush1.msra.mxu0 %v147
    %1026 = vmatprep.subr.mxu0 0.0
    %1027 = vmatpush1.msra.mxu0 %v152
    %1028 = vmatprep.subr.mxu0 0.0
    %1029 = vmatpush1.msra.mxu0 %v157
    %1030 = vmatprep.subr.mxu0 0.0
    %1031 = vmatpush1.msra.mxu0 %v162
    %1032 = vmatprep.subr.mxu0 0.0
    %1033 = vmatpush1.msra.mxu0 0.0
    %1034 = vmatprep.subr.mxu0 0.0
    %1035 = vmatpush1.msra.mxu0 0.0
    %1036 = vmatprep.subr.mxu0 0.0
    %1037 = vmatpush1.msra.mxu0 0.0
    %1038 = vmatprep.subr.mxu0 0.0
    %1039 = vmatpush1.msra.mxu0 0.0
    %1040 = vmatprep.subr.mxu0 0.0
    %1041 = vmatpush1.msra.mxu0 0.0
    %1042 = vmatprep.subr.mxu0 0.0
    %1043 = vmatpush1.msra.mxu0 0.0
    %1044 = vmatprep.subr.mxu0 0.0
    %1045 = vmatpush1.msra.mxu0 0.0
    %1046 = vmatprep.subr.mxu0 0.0
    %1047 = vmatpush1.msra.mxu0 0.0
    %1048 = vmatprep.subr.mxu0 0.0
    %1049 = vmatpush1.msra.mxu0 0.0
    %1050 = vmatprep.subr.mxu0 0.0
    %1051 = vmatpush1.msra.mxu0 0.0
    %1052 = vmatprep.subr.mxu0 0.0
    %1053 = vmatpush1.msra.mxu0 0.0
    %1054 = vmatprep.subr.mxu0 0.0
    %1055 = vmatpush1.msra.mxu0 0.0
    %1056 = vmatprep.subr.mxu0 0.0
    %1057 = vmatpush1.msra.mxu0 0.0
    %1058 = vmatprep.subr.mxu0 0.0
    %1059 = vmatpush1.msra.mxu0 0.0
    %1060 = vmatprep.subr.mxu0 0.0
    %1061 = vmatpush1.msra.mxu0 0.0
    %1062 = vmatprep.subr.mxu0 0.0
    %1063 = vmatpush1.msra.mxu0 0.0
    %1064 = vmatprep.subr.mxu0 0.0
    %1065 = vmatpush1.msra.mxu0 0.0
    %1066 = vmatprep.subr.mxu0 0.0
    %1067 = vmatpush1.msra.mxu0 0.0
    %1068 = vmatprep.subr.mxu0 0.0
    %1069 = vmatpush1.msra.mxu0 0.0
    %1070 = vmatprep.subr.mxu0 0.0
    %1071 = vmatpush1.msra.mxu0 0.0
    %1072 = vmatprep.subr.mxu0 0.0
    %1073 = vmatpush1.msra.mxu0 0.0
    %1074 = vmatprep.subr.mxu0 0.0
    %1075 = vmatpush1.msra.mxu0 0.0
    %1076 = vmatprep.subr.mxu0 0.0
    %1077 = vmatpush1.msra.mxu0 0.0
    %1078 = vmatprep.subr.mxu0 0.0
    %1079 = vmatpush1.msra.mxu0 0.0
    %1080 = vmatprep.subr.mxu0 0.0
    %1081 = vmatpush1.msra.mxu0 0.0
    %1082 = vmatprep.subr.mxu0 0.0
    %1083 = vmatpush1.msra.mxu0 0.0
    %1084 = vmatprep.subr.mxu0 0.0
    %1085 = vmatpush1.msra.mxu0 0.0
    %1086 = vmatprep.subr.mxu0 0.0
    %1087 = vmatpush1.msra.mxu0 0.0
    %1088 = vmatprep.mubr.f32.mxu0 0.0
    %1089 = vmatmul.mubr.f32.gmra.mrb[0].mxu0 %v1022
    %v1090 = vpop.f32.mrb[0].mxu0
    %v1091 = vadd.f32 %v1018, %v1090
    %v1092 = vpop.f32.mrb[0].mxu0
    %1093 = vdwg.mxu0
    %v1094 = vadd.f32 %v1091, %v326
    %v1095 = vxor.u32 %v1094, 2147483648
    %v1096 = vmul.f32 %v1095, 1.442695
    %v1097 = vpow.pop %v1096
    %v1098 = vadd.f32 %v1097, 1.0
    %v1099 = vrcp.pop %v1098
    %v1100 = vmul.f32 1.0, %v1099
    %v1101 = vtanh.pop %v1094
    %v1102 = vmul.f32 %v1100, %v860
    %1104 = vrot.lane.b32.xlu0 %v1101, 64
    %v1105 = vpop.permute.xlu0 %1104
    %v1107 = vmul.f32 %v1100, %v1105
    %1109 = vrot.lane.b32.xlu0 %v1107, 32
    %v1110 = vpop.permute.xlu0 %1109
    %v1112 = vadd.f32 %v1102, %v1110
    %v1113 = vtanh.pop %v1112
    %1115 = vrot.lane.b32.xlu0 %v1113, 64
    %v1116 = vpop.permute.xlu0 %1115
    %v1118 = vmul.f32 %v1100, %v1116
    %1120 = vrot.lane.b32.xlu0 %v1118, 32
    %v1121 = vpop.permute.xlu0 %1120
    %v1122 = vsel %vm175, %v1121, 0
    %1124 = vmatprep.subr.mxu0 0.0
    %1125 = vmatpush1.msra.mxu0 %v62
    %1126 = vmatprep.subr.mxu0 0.0
    %1127 = vmatpush1.msra.mxu0 %v63
    %1128 = vmatprep.subr.mxu0 0.0
    %1129 = vmatpush1.msra.mxu0 %v64
    %1130 = vmatprep.subr.mxu0 0.0
    %1131 = vmatpush1.msra.mxu0 %v65
    %1132 = vmatprep.subr.mxu0 0.0
    %1133 = vmatpush1.msra.mxu0 0.0
    %1134 = vmatprep.subr.mxu0 0.0
    %1135 = vmatpush1.msra.mxu0 0.0
    %1136 = vmatprep.subr.mxu0 0.0
    %1137 = vmatpush1.msra.mxu0 0.0
    %1138 = vmatprep.subr.mxu0 0.0
    %1139 = vmatpush1.msra.mxu0 0.0
    %1140 = vmatprep.subr.mxu0 0.0
    %1141 = vmatpush1.msra.mxu0 0.0
    %1142 = vmatprep.subr.mxu0 0.0
    %1143 = vmatpush1.msra.mxu0 0.0
    %1144 = vmatprep.subr.mxu0 0.0
    %1145 = vmatpush1.msra.mxu0 0.0
    %1146 = vmatprep.subr.mxu0 0.0
    %1147 = vmatpush1.msra.mxu0 0.0
    %1148 = vmatprep.subr.mxu0 0.0
    %1149 = vmatpush1.msra.mxu0 0.0
    %1150 = vmatprep.subr.mxu0 0.0
    %1151 = vmatpush1.msra.mxu0 0.0
    %1152 = vmatprep.subr.mxu0 0.0
    %1153 = vmatpush1.msra.mxu0 0.0
    %1154 = vmatprep.subr.mxu0 0.0
    %1155 = vmatpush1.msra.mxu0 0.0
    %1156 = vmatprep.subr.mxu0 0.0
    %1157 = vmatpush1.msra.mxu0 0.0
    %1158 = vmatprep.subr.mxu0 0.0
    %1159 = vmatpush1.msra.mxu0 0.0
    %1160 = vmatprep.subr.mxu0 0.0
    %1161 = vmatpush1.msra.mxu0 0.0
    %1162 = vmatprep.subr.mxu0 0.0
    %1163 = vmatpush1.msra.mxu0 0.0
    %1164 = vmatprep.subr.mxu0 0.0
    %1165 = vmatpush1.msra.mxu0 0.0
    %1166 = vmatprep.subr.mxu0 0.0
    %1167 = vmatpush1.msra.mxu0 0.0
    %1168 = vmatprep.subr.mxu0 0.0
    %1169 = vmatpush1.msra.mxu0 0.0
    %1170 = vmatprep.subr.mxu0 0.0
    %1171 = vmatpush1.msra.mxu0 0.0
    %1172 = vmatprep.subr.mxu0 0.0
    %1173 = vmatpush1.msra.mxu0 0.0
    %1174 = vmatprep.subr.mxu0 0.0
    %1175 = vmatpush1.msra.mxu0 0.0
    %1176 = vmatprep.subr.mxu0 0.0
    %1177 = vmatpush1.msra.mxu0 0.0
    %1178 = vmatprep.subr.mxu0 0.0
    %1179 = vmatpush1.msra.mxu0 0.0
    %1180 = vmatprep.subr.mxu0 0.0
    %1181 = vmatpush1.msra.mxu0 0.0
    %1182 = vmatprep.subr.mxu0 0.0
    %1183 = vmatpush1.msra.mxu0 0.0
    %1184 = vmatprep.subr.mxu0 0.0
    %1185 = vmatpush1.msra.mxu0 0.0
    %1186 = vmatprep.subr.mxu0 0.0
    %1187 = vmatpush1.msra.mxu0 0.0
    %1188 = vmatprep.mubr.f32.mxu0 0.0
    %1189 = vmatmul.mubr.f32.gmra.mrb[0].mxu0 %v1122
    %v1190 = vpop.f32.mrb[0].mxu0
    %v1191 = vadd.f32 %v361, %v1190
    %v1192 = vpop.f32.mrb[0].mxu0
    %1193 = vdwg.mxu0
    %s1194 = scalar_lea.vmem [#allocation5], 6
    %1195 = vst.msk [vmem:[%s1194] sm:$0x3] %vm438, %v1191
    %s1196 = scalar_lea.vmem %s0, 8
    %v1197 = vld [vmem:[%s1196] sm:$0x3]
    %1198 = vset.pattern.permute.xlu0 0
    %1199 = vperm.xlu0 %1198, %v1197
    %v1200 = vpop.permute.xlu0 %1199
    %vm1201 = vcmp.eq.s32.totalorder %v166, %v1200
    %v1202 = vsel %vm1201, 1.0, 0.0
    %1203 = vmatprep.subr.mxu0 0.0
    %1204 = vmatpush1.msra.mxu0 %v57
    %1205 = vmatprep.subr.mxu0 0.0
    %1206 = vmatpush1.msra.mxu0 %v58
    %1207 = vmatprep.subr.mxu0 0.0
    %1208 = vmatpush1.msra.mxu0 %v59
    %1209 = vmatprep.subr.mxu0 0.0
    %1210 = vmatpush1.msra.mxu0 %v60
    %1211 = vmatprep.subr.mxu0 0.0
    %1212 = vmatpush1.msra.mxu0 0.0
    %1213 = vmatprep.subr.mxu0 0.0
    %1214 = vmatpush1.msra.mxu0 0.0
    %1215 = vmatprep.subr.mxu0 0.0
    %1216 = vmatpush1.msra.mxu0 0.0
    %1217 = vmatprep.subr.mxu0 0.0
    %1218 = vmatpush1.msra.mxu0 0.0
    %1219 = vmatprep.subr.mxu0 0.0
    %1220 = vmatpush1.msra.mxu0 0.0
    %1221 = vmatprep.subr.mxu0 0.0
    %1222 = vmatpush1.msra.mxu0 0.0
    %1223 = vmatprep.subr.mxu0 0.0
    %1224 = vmatpush1.msra.mxu0 0.0
    %1225 = vmatprep.subr.mxu0 0.0
    %1226 = vmatpush1.msra.mxu0 0.0
    %1227 = vmatprep.subr.mxu0 0.0
    %1228 = vmatpush1.msra.mxu0 0.0
    %1229 = vmatprep.subr.mxu0 0.0
    %1230 = vmatpush1.msra.mxu0 0.0
    %1231 = vmatprep.subr.mxu0 0.0
    %1232 = vmatpush1.msra.mxu0 0.0
    %1233 = vmatprep.subr.mxu0 0.0
    %1234 = vmatpush1.msra.mxu0 0.0
    %1235 = vmatprep.subr.mxu0 0.0
    %1236 = vmatpush1.msra.mxu0 0.0
    %1237 = vmatprep.subr.mxu0 0.0
    %1238 = vmatpush1.msra.mxu0 0.0
    %1239 = vmatprep.subr.mxu0 0.0
    %1240 = vmatpush1.msra.mxu0 0.0
    %1241 = vmatprep.subr.mxu0 0.0
    %1242 = vmatpush1.msra.mxu0 0.0
    %1243 = vmatprep.subr.mxu0 0.0
    %1244 = vmatpush1.msra.mxu0 0.0
    %1245 = vmatprep.subr.mxu0 0.0
    %1246 = vmatpush1.msra.mxu0 0.0
    %1247 = vmatprep.subr.mxu0 0.0
    %1248 = vmatpush1.msra.mxu0 0.0
    %1249 = vmatprep.subr.mxu0 0.0
    %1250 = vmatpush1.msra.mxu0 0.0
    %1251 = vmatprep.subr.mxu0 0.0
    %1252 = vmatpush1.msra.mxu0 0.0
    %1253 = vmatprep.subr.mxu0 0.0
    %1254 = vmatpush1.msra.mxu0 0.0
    %1255 = vmatprep.subr.mxu0 0.0
    %1256 = vmatpush1.msra.mxu0 0.0
    %1257 = vmatprep.subr.mxu0 0.0
    %1258 = vmatpush1.msra.mxu0 0.0
    %1259 = vmatprep.subr.mxu0 0.0
    %1260 = vmatpush1.msra.mxu0 0.0
    %1261 = vmatprep.subr.mxu0 0.0
    %1262 = vmatpush1.msra.mxu0 0.0
    %1263 = vmatprep.subr.mxu0 0.0
    %1264 = vmatpush1.msra.mxu0 0.0
    %1265 = vmatprep.subr.mxu0 0.0
    %1266 = vmatpush1.msra.mxu0 0.0
    %1267 = vmatprep.mubr.f32.mxu0 0.0
    %1268 = vmatmul.mubr.f32.gmra.mrb[0].mxu0 %v1122
    %v1269 = vpop.f32.mrb[0].mxu0
    %v1270 = vadd.f32 0.0, %v1269
    %v1271 = vpop.f32.mrb[0].mxu0
    %1272 = vdwg.mxu0
    %v1274 = vsel %vm175, %v1202, 0
    %1276 = vmatprep.subr.mxu0 0.0
    %1277 = vmatpush1.msra.mxu0 %v147
    %1278 = vmatprep.subr.mxu0 0.0
    %1279 = vmatpush1.msra.mxu0 %v152
    %1280 = vmatprep.subr.mxu0 0.0
    %1281 = vmatpush1.msra.mxu0 %v157
    %1282 = vmatprep.subr.mxu0 0.0
    %1283 = vmatpush1.msra.mxu0 %v162
    %1284 = vmatprep.subr.mxu0 0.0
    %1285 = vmatpush1.msra.mxu0 0.0
    %1286 = vmatprep.subr.mxu0 0.0
    %1287 = vmatpush1.msra.mxu0 0.0
    %1288 = vmatprep.subr.mxu0 0.0
    %1289 = vmatpush1.msra.mxu0 0.0
    %1290 = vmatprep.subr.mxu0 0.0
    %1291 = vmatpush1.msra.mxu0 0.0
    %1292 = vmatprep.subr.mxu0 0.0
    %1293 = vmatpush1.msra.mxu0 0.0
    %1294 = vmatprep.subr.mxu0 0.0
    %1295 = vmatpush1.msra.mxu0 0.0
    %1296 = vmatprep.subr.mxu0 0.0
    %1297 = vmatpush1.msra.mxu0 0.0
    %1298 = vmatprep.subr.mxu0 0.0
    %1299 = vmatpush1.msra.mxu0 0.0
    %1300 = vmatprep.subr.mxu0 0.0
    %1301 = vmatpush1.msra.mxu0 0.0
    %1302 = vmatprep.subr.mxu0 0.0
    %1303 = vmatpush1.msra.mxu0 0.0
    %1304 = vmatprep.subr.mxu0 0.0
    %1305 = vmatpush1.msra.mxu0 0.0
    %1306 = vmatprep.subr.mxu0 0.0
    %1307 = vmatpush1.msra.mxu0 0.0
    %1308 = vmatprep.subr.mxu0 0.0
    %1309 = vmatpush1.msra.mxu0 0.0
    %1310 = vmatprep.subr.mxu0 0.0
    %1311 = vmatpush1.msra.mxu0 0.0
    %1312 = vmatprep.subr.mxu0 0.0
    %1313 = vmatpush1.msra.mxu0 0.0
    %1314 = vmatprep.subr.mxu0 0.0
    %1315 = vmatpush1.msra.mxu0 0.0
    %1316 = vmatprep.subr.mxu0 0.0
    %1317 = vmatpush1.msra.mxu0 0.0
    %1318 = vmatprep.subr.mxu0 0.0
    %1319 = vmatpush1.msra.mxu0 0.0
    %1320 = vmatprep.subr.mxu0 0.0
    %1321 = vmatpush1.msra.mxu0 0.0
    %1322 = vmatprep.subr.mxu0 0.0
    %1323 = vmatpush1.msra.mxu0 0.0
    %1324 = vmatprep.subr.mxu0 0.0
    %1325 = vmatpush1.msra.mxu0 0.0
    %1326 = vmatprep.subr.mxu0 0.0
    %1327 = vmatpush1.msra.mxu0 0.0
    %1328 = vmatprep.subr.mxu0 0.0
    %1329 = vmatpush1.msra.mxu0 0.0
    %1330 = vmatprep.subr.mxu0 0.0
    %1331 = vmatpush1.msra.mxu0 0.0
    %1332 = vmatprep.subr.mxu0 0.0
    %1333 = vmatpush1.msra.mxu0 0.0
    %1334 = vmatprep.subr.mxu0 0.0
    %1335 = vmatpush1.msra.mxu0 0.0
    %1336 = vmatprep.subr.mxu0 0.0
    %1337 = vmatpush1.msra.mxu0 0.0
    %1338 = vmatprep.subr.mxu0 0.0
    %1339 = vmatpush1.msra.mxu0 0.0
    %1340 = vmatprep.mubr.f32.mxu0 0.0
    %1341 = vmatmul.mubr.f32.gmra.mrb[0].mxu0 %v1274
    %v1342 = vpop.f32.mrb[0].mxu0
    %v1343 = vadd.f32 %v1270, %v1342
    %v1344 = vpop.f32.mrb[0].mxu0
    %1345 = vdwg.mxu0
    %v1346 = vadd.f32 %v1343, %v326
    %v1347 = vxor.u32 %v1346, 2147483648
    %v1348 = vmul.f32 %v1347, 1.442695
    %v1349 = vpow.pop %v1348
    %v1350 = vadd.f32 %v1349, 1.0
    %v1351 = vrcp.pop %v1350
    %v1352 = vmul.f32 1.0, %v1351
    %v1353 = vtanh.pop %v1346
    %v1354 = vmul.f32 %v1352, %v1112
    %1356 = vrot.lane.b32.xlu0 %v1353, 64
    %v1357 = vpop.permute.xlu0 %1356
    %v1359 = vmul.f32 %v1352, %v1357
    %1361 = vrot.lane.b32.xlu0 %v1359, 32
    %v1362 = vpop.permute.xlu0 %1361
    %v1364 = vadd.f32 %v1354, %v1362
    %v1365 = vtanh.pop %v1364
    %1367 = vrot.lane.b32.xlu0 %v1365, 64
    %v1368 = vpop.permute.xlu0 %1367
    %v1370 = vmul.f32 %v1352, %v1368
    %1372 = vrot.lane.b32.xlu0 %v1370, 32
    %v1373 = vpop.permute.xlu0 %1372
    %v1374 = vsel %vm175, %v1373, 0
    %1376 = vmatprep.subr.mxu0 0.0
    %1377 = vmatpush1.msra.mxu0 %v62
    %1378 = vmatprep.subr.mxu0 0.0
    %1379 = vmatpush1.msra.mxu0 %v63
    %1380 = vmatprep.subr.mxu0 0.0
    %1381 = vmatpush1.msra.mxu0 %v64
    %1382 = vmatprep.subr.mxu0 0.0
    %1383 = vmatpush1.msra.mxu0 %v65
    %1384 = vmatprep.subr.mxu0 0.0
    %1385 = vmatpush1.msra.mxu0 0.0
    %1386 = vmatprep.subr.mxu0 0.0
    %1387 = vmatpush1.msra.mxu0 0.0
    %1388 = vmatprep.subr.mxu0 0.0
    %1389 = vmatpush1.msra.mxu0 0.0
    %1390 = vmatprep.subr.mxu0 0.0
    %1391 = vmatpush1.msra.mxu0 0.0
    %1392 = vmatprep.subr.mxu0 0.0
    %1393 = vmatpush1.msra.mxu0 0.0
    %1394 = vmatprep.subr.mxu0 0.0
    %1395 = vmatpush1.msra.mxu0 0.0
    %1396 = vmatprep.subr.mxu0 0.0
    %1397 = vmatpush1.msra.mxu0 0.0
    %1398 = vmatprep.subr.mxu0 0.0
    %1399 = vmatpush1.msra.mxu0 0.0
    %1400 = vmatprep.subr.mxu0 0.0
    %1401 = vmatpush1.msra.mxu0 0.0
    %1402 = vmatprep.subr.mxu0 0.0
    %1403 = vmatpush1.msra.mxu0 0.0
    %1404 = vmatprep.subr.mxu0 0.0
    %1405 = vmatpush1.msra.mxu0 0.0
    %1406 = vmatprep.subr.mxu0 0.0
    %1407 = vmatpush1.msra.mxu0 0.0
    %1408 = vmatprep.subr.mxu0 0.0
    %1409 = vmatpush1.msra.mxu0 0.0
    %1410 = vmatprep.subr.mxu0 0.0
    %1411 = vmatpush1.msra.mxu0 0.0
    %1412 = vmatprep.subr.mxu0 0.0
    %1413 = vmatpush1.msra.mxu0 0.0
    %1414 = vmatprep.subr.mxu0 0.0
    %1415 = vmatpush1.msra.mxu0 0.0
    %1416 = vmatprep.subr.mxu0 0.0
    %1417 = vmatpush1.msra.mxu0 0.0
    %1418 = vmatprep.subr.mxu0 0.0
    %1419 = vmatpush1.msra.mxu0 0.0
    %1420 = vmatprep.subr.mxu0 0.0
    %1421 = vmatpush1.msra.mxu0 0.0
    %1422 = vmatprep.subr.mxu0 0.0
    %1423 = vmatpush1.msra.mxu0 0.0
    %1424 = vmatprep.subr.mxu0 0.0
    %1425 = vmatpush1.msra.mxu0 0.0
    %1426 = vmatprep.subr.mxu0 0.0
    %1427 = vmatpush1.msra.mxu0 0.0
    %1428 = vmatprep.subr.mxu0 0.0
    %1429 = vmatpush1.msra.mxu0 0.0
    %1430 = vmatprep.subr.mxu0 0.0
    %1431 = vmatpush1.msra.mxu0 0.0
    %1432 = vmatprep.subr.mxu0 0.0
    %1433 = vmatpush1.msra.mxu0 0.0
    %1434 = vmatprep.subr.mxu0 0.0
    %1435 = vmatpush1.msra.mxu0 0.0
    %1436 = vmatprep.subr.mxu0 0.0
    %1437 = vmatpush1.msra.mxu0 0.0
    %1438 = vmatprep.subr.mxu0 0.0
    %1439 = vmatpush1.msra.mxu0 0.0
    %1440 = vmatprep.mubr.f32.mxu0 0.0
    %1441 = vmatmul.mubr.f32.gmra.mrb[0].mxu0 %v1374
    %v1442 = vpop.f32.mrb[0].mxu0
    %v1443 = vadd.f32 %v361, %v1442
    %v1444 = vpop.f32.mrb[0].mxu0
    %1445 = vdwg.mxu0
    %s1446 = scalar_lea.vmem [#allocation5], 8
    %1447 = vst.msk [vmem:[%s1446] sm:$0x3] %vm438, %v1443
    %s1448 = scalar_lea.vmem %s0, 10
    %v1449 = vld [vmem:[%s1448] sm:$0x3]
    %1450 = vset.pattern.permute.xlu0 0
    %1451 = vperm.xlu0 %1450, %v1449
    %v1452 = vpop.permute.xlu0 %1451
    %vm1453 = vcmp.eq.s32.totalorder %v166, %v1452
    %v1454 = vsel %vm1453, 1.0, 0.0
    %1455 = vmatprep.subr.mxu0 0.0
    %1456 = vmatpush1.msra.mxu0 %v57
    %1457 = vmatprep.subr.mxu0 0.0
    %1458 = vmatpush1.msra.mxu0 %v58
    %1459 = vmatprep.subr.mxu0 0.0
    %1460 = vmatpush1.msra.mxu0 %v59
    %1461 = vmatprep.subr.mxu0 0.0
    %1462 = vmatpush1.msra.mxu0 %v60
    %1463 = vmatprep.subr.mxu0 0.0
    %1464 = vmatpush1.msra.mxu0 0.0
    %1465 = vmatprep.subr.mxu0 0.0
    %1466 = vmatpush1.msra.mxu0 0.0
    %1467 = vmatprep.subr.mxu0 0.0
    %1468 = vmatpush1.msra.mxu0 0.0
    %1469 = vmatprep.subr.mxu0 0.0
    %1470 = vmatpush1.msra.mxu0 0.0
    %1471 = vmatprep.subr.mxu0 0.0
    %1472 = vmatpush1.msra.mxu0 0.0
    %1473 = vmatprep.subr.mxu0 0.0
    %1474 = vmatpush1.msra.mxu0 0.0
    %1475 = vmatprep.subr.mxu0 0.0
    %1476 = vmatpush1.msra.mxu0 0.0
    %1477 = vmatprep.subr.mxu0 0.0
    %1478 = vmatpush1.msra.mxu0 0.0
    %1479 = vmatprep.subr.mxu0 0.0
    %1480 = vmatpush1.msra.mxu0 0.0
    %1481 = vmatprep.subr.mxu0 0.0
    %1482 = vmatpush1.msra.mxu0 0.0
    %1483 = vmatprep.subr.mxu0 0.0
    %1484 = vmatpush1.msra.mxu0 0.0
    %1485 = vmatprep.subr.mxu0 0.0
    %1486 = vmatpush1.msra.mxu0 0.0
    %1487 = vmatprep.subr.mxu0 0.0
    %1488 = vmatpush1.msra.mxu0 0.0
    %1489 = vmatprep.subr.mxu0 0.0
    %1490 = vmatpush1.msra.mxu0 0.0
    %1491 = vmatprep.subr.mxu0 0.0
    %1492 = vmatpush1.msra.mxu0 0.0
    %1493 = vmatprep.subr.mxu0 0.0
    %1494 = vmatpush1.msra.mxu0 0.0
    %1495 = vmatprep.subr.mxu0 0.0
    %1496 = vmatpush1.msra.mxu0 0.0
    %1497 = vmatprep.subr.mxu0 0.0
    %1498 = vmatpush1.msra.mxu0 0.0
    %1499 = vmatprep.subr.mxu0 0.0
    %1500 = vmatpush1.msra.mxu0 0.0
    %1501 = vmatprep.subr.mxu0 0.0
    %1502 = vmatpush1.msra.mxu0 0.0
    %1503 = vmatprep.subr.mxu0 0.0
    %1504 = vmatpush1.msra.mxu0 0.0
    %1505 = vmatprep.subr.mxu0 0.0
    %1506 = vmatpush1.msra.mxu0 0.0
    %1507 = vmatprep.subr.mxu0 0.0
    %1508 = vmatpush1.msra.mxu0 0.0
    %1509 = vmatprep.subr.mxu0 0.0
    %1510 = vmatpush1.msra.mxu0 0.0
    %1511 = vmatprep.subr.mxu0 0.0
    %1512 = vmatpush1.msra.mxu0 0.0
    %1513 = vmatprep.subr.mxu0 0.0
    %1514 = vmatpush1.msra.mxu0 0.0
    %1515 = vmatprep.subr.mxu0 0.0
    %1516 = vmatpush1.msra.mxu0 0.0
    %1517 = vmatprep.subr.mxu0 0.0
    %1518 = vmatpush1.msra.mxu0 0.0
    %1519 = vmatprep.mubr.f32.mxu0 0.0
    %1520 = vmatmul.mubr.f32.gmra.mrb[0].mxu0 %v1374
    %v1521 = vpop.f32.mrb[0].mxu0
    %v1522 = vadd.f32 0.0, %v1521
    %v1523 = vpop.f32.mrb[0].mxu0
    %1524 = vdwg.mxu0
    %v1526 = vsel %vm175, %v1454, 0
    %1528 = vmatprep.subr.mxu0 0.0
    %1529 = vmatpush1.msra.mxu0 %v147
    %1530 = vmatprep.subr.mxu0 0.0
    %1531 = vmatpush1.msra.mxu0 %v152
    %1532 = vmatprep.subr.mxu0 0.0
    %1533 = vmatpush1.msra.mxu0 %v157
    %1534 = vmatprep.subr.mxu0 0.0
    %1535 = vmatpush1.msra.mxu0 %v162
    %1536 = vmatprep.subr.mxu0 0.0
    %1537 = vmatpush1.msra.mxu0 0.0
    %1538 = vmatprep.subr.mxu0 0.0
    %1539 = vmatpush1.msra.mxu0 0.0
    %1540 = vmatprep.subr.mxu0 0.0
    %1541 = vmatpush1.msra.mxu0 0.0
    %1542 = vmatprep.subr.mxu0 0.0
    %1543 = vmatpush1.msra.mxu0 0.0
    %1544 = vmatprep.subr.mxu0 0.0
    %1545 = vmatpush1.msra.mxu0 0.0
    %1546 = vmatprep.subr.mxu0 0.0
    %1547 = vmatpush1.msra.mxu0 0.0
    %1548 = vmatprep.subr.mxu0 0.0
    %1549 = vmatpush1.msra.mxu0 0.0
    %1550 = vmatprep.subr.mxu0 0.0
    %1551 = vmatpush1.msra.mxu0 0.0
    %1552 = vmatprep.subr.mxu0 0.0
    %1553 = vmatpush1.msra.mxu0 0.0
    %1554 = vmatprep.subr.mxu0 0.0
    %1555 = vmatpush1.msra.mxu0 0.0
    %1556 = vmatprep.subr.mxu0 0.0
    %1557 = vmatpush1.msra.mxu0 0.0
    %1558 = vmatprep.subr.mxu0 0.0
    %1559 = vmatpush1.msra.mxu0 0.0
    %1560 = vmatprep.subr.mxu0 0.0
    %1561 = vmatpush1.msra.mxu0 0.0
    %1562 = vmatprep.subr.mxu0 0.0
    %1563 = vmatpush1.msra.mxu0 0.0
    %1564 = vmatprep.subr.mxu0 0.0
    %1565 = vmatpush1.msra.mxu0 0.0
    %1566 = vmatprep.subr.mxu0 0.0
    %1567 = vmatpush1.msra.mxu0 0.0
    %1568 = vmatprep.subr.mxu0 0.0
    %1569 = vmatpush1.msra.mxu0 0.0
    %1570 = vmatprep.subr.mxu0 0.0
    %1571 = vmatpush1.msra.mxu0 0.0
    %1572 = vmatprep.subr.mxu0 0.0
    %1573 = vmatpush1.msra.mxu0 0.0
    %1574 = vmatprep.subr.mxu0 0.0
    %1575 = vmatpush1.msra.mxu0 0.0
    %1576 = vmatprep.subr.mxu0 0.0
    %1577 = vmatpush1.msra.mxu0 0.0
    %1578 = vmatprep.subr.mxu0 0.0
    %1579 = vmatpush1.msra.mxu0 0.0
    %1580 = vmatprep.subr.mxu0 0.0
    %1581 = vmatpush1.msra.mxu0 0.0
    %1582 = vmatprep.subr.mxu0 0.0
    %1583 = vmatpush1.msra.mxu0 0.0
    %1584 = vmatprep.subr.mxu0 0.0
    %1585 = vmatpush1.msra.mxu0 0.0
    %1586 = vmatprep.subr.mxu0 0.0
    %1587 = vmatpush1.msra.mxu0 0.0
    %1588 = vmatprep.subr.mxu0 0.0
    %1589 = vmatpush1.msra.mxu0 0.0
    %1590 = vmatprep.subr.mxu0 0.0
    %1591 = vmatpush1.msra.mxu0 0.0
    %1592 = vmatprep.mubr.f32.mxu0 0.0
    %1593 = vmatmul.mubr.f32.gmra.mrb[0].mxu0 %v1526
    %v1594 = vpop.f32.mrb[0].mxu0
    %v1595 = vadd.f32 %v1522, %v1594
    %v1596 = vpop.f32.mrb[0].mxu0
    %1597 = vdwg.mxu0
    %v1598 = vadd.f32 %v1595, %v326
    %v1599 = vxor.u32 %v1598, 2147483648
    %v1600 = vmul.f32 %v1599, 1.442695
    %v1601 = vpow.pop %v1600
    %v1602 = vadd.f32 %v1601, 1.0
    %v1603 = vrcp.pop %v1602
    %v1604 = vmul.f32 1.0, %v1603
    %v1605 = vtanh.pop %v1598
    %v1606 = vmul.f32 %v1604, %v1364
    %1608 = vrot.lane.b32.xlu0 %v1605, 64
    %v1609 = vpop.permute.xlu0 %1608
    %v1611 = vmul.f32 %v1604, %v1609
    %1613 = vrot.lane.b32.xlu0 %v1611, 32
    %v1614 = vpop.permute.xlu0 %1613
    %v1616 = vadd.f32 %v1606, %v1614
    %v1617 = vtanh.pop %v1616
    %1619 = vrot.lane.b32.xlu0 %v1617, 64
    %v1620 = vpop.permute.xlu0 %1619
    %v1622 = vmul.f32 %v1604, %v1620
    %1624 = vrot.lane.b32.xlu0 %v1622, 32
    %v1625 = vpop.permute.xlu0 %1624
    %v1626 = vsel %vm175, %v1625, 0
    %1628 = vmatprep.subr.mxu0 0.0
    %1629 = vmatpush1.msra.mxu0 %v62
    %1630 = vmatprep.subr.mxu0 0.0
    %1631 = vmatpush1.msra.mxu0 %v63
    %1632 = vmatprep.subr.mxu0 0.0
    %1633 = vmatpush1.msra.mxu0 %v64
    %1634 = vmatprep.subr.mxu0 0.0
    %1635 = vmatpush1.msra.mxu0 %v65
    %1636 = vmatprep.subr.mxu0 0.0
    %1637 = vmatpush1.msra.mxu0 0.0
    %1638 = vmatprep.subr.mxu0 0.0
    %1639 = vmatpush1.msra.mxu0 0.0
    %1640 = vmatprep.subr.mxu0 0.0
    %1641 = vmatpush1.msra.mxu0 0.0
    %1642 = vmatprep.subr.mxu0 0.0
    %1643 = vmatpush1.msra.mxu0 0.0
    %1644 = vmatprep.subr.mxu0 0.0
    %1645 = vmatpush1.msra.mxu0 0.0
    %1646 = vmatprep.subr.mxu0 0.0
    %1647 = vmatpush1.msra.mxu0 0.0
    %1648 = vmatprep.subr.mxu0 0.0
    %1649 = vmatpush1.msra.mxu0 0.0
    %1650 = vmatprep.subr.mxu0 0.0
    %1651 = vmatpush1.msra.mxu0 0.0
    %1652 = vmatprep.subr.mxu0 0.0
    %1653 = vmatpush1.msra.mxu0 0.0
    %1654 = vmatprep.subr.mxu0 0.0
    %1655 = vmatpush1.msra.mxu0 0.0
    %1656 = vmatprep.subr.mxu0 0.0
    %1657 = vmatpush1.msra.mxu0 0.0
    %1658 = vmatprep.subr.mxu0 0.0
    %1659 = vmatpush1.msra.mxu0 0.0
    %1660 = vmatprep.subr.mxu0 0.0
    %1661 = vmatpush1.msra.mxu0 0.0
    %1662 = vmatprep.subr.mxu0 0.0
    %1663 = vmatpush1.msra.mxu0 0.0
    %1664 = vmatprep.subr.mxu0 0.0
    %1665 = vmatpush1.msra.mxu0 0.0
    %1666 = vmatprep.subr.mxu0 0.0
    %1667 = vmatpush1.msra.mxu0 0.0
    %1668 = vmatprep.subr.mxu0 0.0
    %1669 = vmatpush1.msra.mxu0 0.0
    %1670 = vmatprep.subr.mxu0 0.0
    %1671 = vmatpush1.msra.mxu0 0.0
    %1672 = vmatprep.subr.mxu0 0.0
    %1673 = vmatpush1.msra.mxu0 0.0
    %1674 = vmatprep.subr.mxu0 0.0
    %1675 = vmatpush1.msra.mxu0 0.0
    %1676 = vmatprep.subr.mxu0 0.0
    %1677 = vmatpush1.msra.mxu0 0.0
    %1678 = vmatprep.subr.mxu0 0.0
    %1679 = vmatpush1.msra.mxu0 0.0
    %1680 = vmatprep.subr.mxu0 0.0
    %1681 = vmatpush1.msra.mxu0 0.0
    %1682 = vmatprep.subr.mxu0 0.0
    %1683 = vmatpush1.msra.mxu0 0.0
    %1684 = vmatprep.subr.mxu0 0.0
    %1685 = vmatpush1.msra.mxu0 0.0
    %1686 = vmatprep.subr.mxu0 0.0
    %1687 = vmatpush1.msra.mxu0 0.0
    %1688 = vmatprep.subr.mxu0 0.0
    %1689 = vmatpush1.msra.mxu0 0.0
    %1690 = vmatprep.subr.mxu0 0.0
    %1691 = vmatpush1.msra.mxu0 0.0
    %1692 = vmatprep.mubr.f32.mxu0 0.0
    %1693 = vmatmul.mubr.f32.gmra.mrb[0].mxu0 %v1626
    %v1694 = vpop.f32.mrb[0].mxu0
    %v1695 = vadd.f32 %v361, %v1694
    %v1696 = vpop.f32.mrb[0].mxu0
    %1697 = vdwg.mxu0
    %s1698 = scalar_lea.vmem [#allocation5], 10
    %1699 = vst.msk [vmem:[%s1698] sm:$0x3] %vm438, %v1695
    %s1700 = scalar_lea.vmem %s0, 12
    %v1701 = vld [vmem:[%s1700] sm:$0x3]
    %1702 = vset.pattern.permute.xlu0 0
    %1703 = vperm.xlu0 %1702, %v1701
    %v1704 = vpop.permute.xlu0 %1703
    %vm1705 = vcmp.eq.s32.totalorder %v166, %v1704
    %v1706 = vsel %vm1705, 1.0, 0.0
    %1707 = vmatprep.subr.mxu0 0.0
    %1708 = vmatpush1.msra.mxu0 %v57
    %1709 = vmatprep.subr.mxu0 0.0
    %1710 = vmatpush1.msra.mxu0 %v58
    %1711 = vmatprep.subr.mxu0 0.0
    %1712 = vmatpush1.msra.mxu0 %v59
    %1713 = vmatprep.subr.mxu0 0.0
    %1714 = vmatpush1.msra.mxu0 %v60
    %1715 = vmatprep.subr.mxu0 0.0
    %1716 = vmatpush1.msra.mxu0 0.0
    %1717 = vmatprep.subr.mxu0 0.0
    %1718 = vmatpush1.msra.mxu0 0.0
    %1719 = vmatprep.subr.mxu0 0.0
    %1720 = vmatpush1.msra.mxu0 0.0
    %1721 = vmatprep.subr.mxu0 0.0
    %1722 = vmatpush1.msra.mxu0 0.0
    %1723 = vmatprep.subr.mxu0 0.0
    %1724 = vmatpush1.msra.mxu0 0.0
    %1725 = vmatprep.subr.mxu0 0.0
    %1726 = vmatpush1.msra.mxu0 0.0
    %1727 = vmatprep.subr.mxu0 0.0
    %1728 = vmatpush1.msra.mxu0 0.0
    %1729 = vmatprep.subr.mxu0 0.0
    %1730 = vmatpush1.msra.mxu0 0.0
    %1731 = vmatprep.subr.mxu0 0.0
    %1732 = vmatpush1.msra.mxu0 0.0
    %1733 = vmatprep.subr.mxu0 0.0
    %1734 = vmatpush1.msra.mxu0 0.0
    %1735 = vmatprep.subr.mxu0 0.0
    %1736 = vmatpush1.msra.mxu0 0.0
    %1737 = vmatprep.subr.mxu0 0.0
    %1738 = vmatpush1.msra.mxu0 0.0
    %1739 = vmatprep.subr.mxu0 0.0
    %1740 = vmatpush1.msra.mxu0 0.0
    %1741 = vmatprep.subr.mxu0 0.0
    %1742 = vmatpush1.msra.mxu0 0.0
    %1743 = vmatprep.subr.mxu0 0.0
    %1744 = vmatpush1.msra.mxu0 0.0
    %1745 = vmatprep.subr.mxu0 0.0
    %1746 = vmatpush1.msra.mxu0 0.0
    %1747 = vmatprep.subr.mxu0 0.0
    %1748 = vmatpush1.msra.mxu0 0.0
    %1749 = vmatprep.subr.mxu0 0.0
    %1750 = vmatpush1.msra.mxu0 0.0
    %1751 = vmatprep.subr.mxu0 0.0
    %1752 = vmatpush1.msra.mxu0 0.0
    %1753 = vmatprep.subr.mxu0 0.0
    %1754 = vmatpush1.msra.mxu0 0.0
    %1755 = vmatprep.subr.mxu0 0.0
    %1756 = vmatpush1.msra.mxu0 0.0
    %1757 = vmatprep.subr.mxu0 0.0
    %1758 = vmatpush1.msra.mxu0 0.0
    %1759 = vmatprep.subr.mxu0 0.0
    %1760 = vmatpush1.msra.mxu0 0.0
    %1761 = vmatprep.subr.mxu0 0.0
    %1762 = vmatpush1.msra.mxu0 0.0
    %1763 = vmatprep.subr.mxu0 0.0
    %1764 = vmatpush1.msra.mxu0 0.0
    %1765 = vmatprep.subr.mxu0 0.0
    %1766 = vmatpush1.msra.mxu0 0.0
    %1767 = vmatprep.subr.mxu0 0.0
    %1768 = vmatpush1.msra.mxu0 0.0
    %1769 = vmatprep.subr.mxu0 0.0
    %1770 = vmatpush1.msra.mxu0 0.0
    %1771 = vmatprep.mubr.f32.mxu0 0.0
    %1772 = vmatmul.mubr.f32.gmra.mrb[0].mxu0 %v1626
    %v1773 = vpop.f32.mrb[0].mxu0
    %v1774 = vadd.f32 0.0, %v1773
    %v1775 = vpop.f32.mrb[0].mxu0
    %1776 = vdwg.mxu0
    %v1778 = vsel %vm175, %v1706, 0
    %1780 = vmatprep.subr.mxu0 0.0
    %1781 = vmatpush1.msra.mxu0 %v147
    %1782 = vmatprep.subr.mxu0 0.0
    %1783 = vmatpush1.msra.mxu0 %v152
    %1784 = vmatprep.subr.mxu0 0.0
    %1785 = vmatpush1.msra.mxu0 %v157
    %1786 = vmatprep.subr.mxu0 0.0
    %1787 = vmatpush1.msra.mxu0 %v162
    %1788 = vmatprep.subr.mxu0 0.0
    %1789 = vmatpush1.msra.mxu0 0.0
    %1790 = vmatprep.subr.mxu0 0.0
    %1791 = vmatpush1.msra.mxu0 0.0
    %1792 = vmatprep.subr.mxu0 0.0
    %1793 = vmatpush1.msra.mxu0 0.0
    %1794 = vmatprep.subr.mxu0 0.0
    %1795 = vmatpush1.msra.mxu0 0.0
    %1796 = vmatprep.subr.mxu0 0.0
    %1797 = vmatpush1.msra.mxu0 0.0
    %1798 = vmatprep.subr.mxu0 0.0
    %1799 = vmatpush1.msra.mxu0 0.0
    %1800 = vmatprep.subr.mxu0 0.0
    %1801 = vmatpush1.msra.mxu0 0.0
    %1802 = vmatprep.subr.mxu0 0.0
    %1803 = vmatpush1.msra.mxu0 0.0
    %1804 = vmatprep.subr.mxu0 0.0
    %1805 = vmatpush1.msra.mxu0 0.0
    %1806 = vmatprep.subr.mxu0 0.0
    %1807 = vmatpush1.msra.mxu0 0.0
    %1808 = vmatprep.subr.mxu0 0.0
    %1809 = vmatpush1.msra.mxu0 0.0
    %1810 = vmatprep.subr.mxu0 0.0
    %1811 = vmatpush1.msra.mxu0 0.0
    %1812 = vmatprep.subr.mxu0 0.0
    %1813 = vmatpush1.msra.mxu0 0.0
    %1814 = vmatprep.subr.mxu0 0.0
    %1815 = vmatpush1.msra.mxu0 0.0
    %1816 = vmatprep.subr.mxu0 0.0
    %1817 = vmatpush1.msra.mxu0 0.0
    %1818 = vmatprep.subr.mxu0 0.0
    %1819 = vmatpush1.msra.mxu0 0.0
    %1820 = vmatprep.subr.mxu0 0.0
    %1821 = vmatpush1.msra.mxu0 0.0
    %1822 = vmatprep.subr.mxu0 0.0
    %1823 = vmatpush1.msra.mxu0 0.0
    %1824 = vmatprep.subr.mxu0 0.0
    %1825 = vmatpush1.msra.mxu0 0.0
    %1826 = vmatprep.subr.mxu0 0.0
    %1827 = vmatpush1.msra.mxu0 0.0
    %1828 = vmatprep.subr.mxu0 0.0
    %1829 = vmatpush1.msra.mxu0 0.0
    %1830 = vmatprep.subr.mxu0 0.0
    %1831 = vmatpush1.msra.mxu0 0.0
    %1832 = vmatprep.subr.mxu0 0.0
    %1833 = vmatpush1.msra.mxu0 0.0
    %1834 = vmatprep.subr.mxu0 0.0
    %1835 = vmatpush1.msra.mxu0 0.0
    %1836 = vmatprep.subr.mxu0 0.0
    %1837 = vmatpush1.msra.mxu0 0.0
    %1838 = vmatprep.subr.mxu0 0.0
    %1839 = vmatpush1.msra.mxu0 0.0
    %1840 = vmatprep.subr.mxu0 0.0
    %1841 = vmatpush1.msra.mxu0 0.0
    %1842 = vmatprep.subr.mxu0 0.0
    %1843 = vmatpush1.msra.mxu0 0.0
    %1844 = vmatprep.mubr.f32.mxu0 0.0
    %1845 = vmatmul.mubr.f32.gmra.mrb[0].mxu0 %v1778
    %v1846 = vpop.f32.mrb[0].mxu0
    %v1847 = vadd.f32 %v1774, %v1846
    %v1848 = vpop.f32.mrb[0].mxu0
    %1849 = vdwg.mxu0
    %v1850 = vadd.f32 %v1847, %v326
    %v1851 = vxor.u32 %v1850, 2147483648
    %v1852 = vmul.f32 %v1851, 1.442695
    %v1853 = vpow.pop %v1852
    %v1854 = vadd.f32 %v1853, 1.0
    %v1855 = vrcp.pop %v1854
    %v1856 = vmul.f32 1.0, %v1855
    %v1857 = vtanh.pop %v1850
    %v1858 = vmul.f32 %v1856, %v1616
    %1860 = vrot.lane.b32.xlu0 %v1857, 64
    %v1861 = vpop.permute.xlu0 %1860
    %v1863 = vmul.f32 %v1856, %v1861
    %1865 = vrot.lane.b32.xlu0 %v1863, 32
    %v1866 = vpop.permute.xlu0 %1865
    %v1868 = vadd.f32 %v1858, %v1866
    %v1869 = vtanh.pop %v1868
    %1871 = vrot.lane.b32.xlu0 %v1869, 64
    %v1872 = vpop.permute.xlu0 %1871
    %v1874 = vmul.f32 %v1856, %v1872
    %1876 = vrot.lane.b32.xlu0 %v1874, 32
    %v1877 = vpop.permute.xlu0 %1876
    %v1878 = vsel %vm175, %v1877, 0
    %1880 = vmatprep.subr.mxu0 0.0
    %1881 = vmatpush1.msra.mxu0 %v62
    %1882 = vmatprep.subr.mxu0 0.0
    %1883 = vmatpush1.msra.mxu0 %v63
    %1884 = vmatprep.subr.mxu0 0.0
    %1885 = vmatpush1.msra.mxu0 %v64
    %1886 = vmatprep.subr.mxu0 0.0
    %1887 = vmatpush1.msra.mxu0 %v65
    %1888 = vmatprep.subr.mxu0 0.0
    %1889 = vmatpush1.msra.mxu0 0.0
    %1890 = vmatprep.subr.mxu0 0.0
    %1891 = vmatpush1.msra.mxu0 0.0
    %1892 = vmatprep.subr.mxu0 0.0
    %1893 = vmatpush1.msra.mxu0 0.0
    %1894 = vmatprep.subr.mxu0 0.0
    %1895 = vmatpush1.msra.mxu0 0.0
    %1896 = vmatprep.subr.mxu0 0.0
    %1897 = vmatpush1.msra.mxu0 0.0
    %1898 = vmatprep.subr.mxu0 0.0
    %1899 = vmatpush1.msra.mxu0 0.0
    %1900 = vmatprep.subr.mxu0 0.0
    %1901 = vmatpush1.msra.mxu0 0.0
    %1902 = vmatprep.subr.mxu0 0.0
    %1903 = vmatpush1.msra.mxu0 0.0
    %1904 = vmatprep.subr.mxu0 0.0
    %1905 = vmatpush1.msra.mxu0 0.0
    %1906 = vmatprep.subr.mxu0 0.0
    %1907 = vmatpush1.msra.mxu0 0.0
    %1908 = vmatprep.subr.mxu0 0.0
    %1909 = vmatpush1.msra.mxu0 0.0
    %1910 = vmatprep.subr.mxu0 0.0
    %1911 = vmatpush1.msra.mxu0 0.0
    %1912 = vmatprep.subr.mxu0 0.0
    %1913 = vmatpush1.msra.mxu0 0.0
    %1914 = vmatprep.subr.mxu0 0.0
    %1915 = vmatpush1.msra.mxu0 0.0
    %1916 = vmatprep.subr.mxu0 0.0
    %1917 = vmatpush1.msra.mxu0 0.0
    %1918 = vmatprep.subr.mxu0 0.0
    %1919 = vmatpush1.msra.mxu0 0.0
    %1920 = vmatprep.subr.mxu0 0.0
    %1921 = vmatpush1.msra.mxu0 0.0
    %1922 = vmatprep.subr.mxu0 0.0
    %1923 = vmatpush1.msra.mxu0 0.0
    %1924 = vmatprep.subr.mxu0 0.0
    %1925 = vmatpush1.msra.mxu0 0.0
    %1926 = vmatprep.subr.mxu0 0.0
    %1927 = vmatpush1.msra.mxu0 0.0
    %1928 = vmatprep.subr.mxu0 0.0
    %1929 = vmatpush1.msra.mxu0 0.0
    %1930 = vmatprep.subr.mxu0 0.0
    %1931 = vmatpush1.msra.mxu0 0.0
    %1932 = vmatprep.subr.mxu0 0.0
    %1933 = vmatpush1.msra.mxu0 0.0
    %1934 = vmatprep.subr.mxu0 0.0
    %1935 = vmatpush1.msra.mxu0 0.0
    %1936 = vmatprep.subr.mxu0 0.0
    %1937 = vmatpush1.msra.mxu0 0.0
    %1938 = vmatprep.subr.mxu0 0.0
    %1939 = vmatpush1.msra.mxu0 0.0
    %1940 = vmatprep.subr.mxu0 0.0
    %1941 = vmatpush1.msra.mxu0 0.0
    %1942 = vmatprep.subr.mxu0 0.0
    %1943 = vmatpush1.msra.mxu0 0.0
    %1944 = vmatprep.mubr.f32.mxu0 0.0
    %1945 = vmatmul.mubr.f32.gmra.mrb[0].mxu0 %v1878
    %v1946 = vpop.f32.mrb[0].mxu0
    %v1947 = vadd.f32 %v361, %v1946
    %v1948 = vpop.f32.mrb[0].mxu0
    %1949 = vdwg.mxu0
    %s1950 = scalar_lea.vmem [#allocation5], 12
    %1951 = vst.msk [vmem:[%s1950] sm:$0x3] %vm438, %v1947
    %s1952 = scalar_lea.vmem %s0, 14
    %v1953 = vld [vmem:[%s1952] sm:$0x3]
    %1954 = vset.pattern.permute.xlu0 0
    %1955 = vperm.xlu0 %1954, %v1953
    %v1956 = vpop.permute.xlu0 %1955
    %vm1957 = vcmp.eq.s32.totalorder %v166, %v1956
    %v1958 = vsel %vm1957, 1.0, 0.0
    %1959 = vmatprep.subr.mxu0 0.0
    %1960 = vmatpush1.msra.mxu0 %v57
    %1961 = vmatprep.subr.mxu0 0.0
    %1962 = vmatpush1.msra.mxu0 %v58
    %1963 = vmatprep.subr.mxu0 0.0
    %1964 = vmatpush1.msra.mxu0 %v59
    %1965 = vmatprep.subr.mxu0 0.0
    %1966 = vmatpush1.msra.mxu0 %v60
    %1967 = vmatprep.subr.mxu0 0.0
    %1968 = vmatpush1.msra.mxu0 0.0
    %1969 = vmatprep.subr.mxu0 0.0
    %1970 = vmatpush1.msra.mxu0 0.0
    %1971 = vmatprep.subr.mxu0 0.0
    %1972 = vmatpush1.msra.mxu0 0.0
    %1973 = vmatprep.subr.mxu0 0.0
    %1974 = vmatpush1.msra.mxu0 0.0
    %1975 = vmatprep.subr.mxu0 0.0
    %1976 = vmatpush1.msra.mxu0 0.0
    %1977 = vmatprep.subr.mxu0 0.0
    %1978 = vmatpush1.msra.mxu0 0.0
    %1979 = vmatprep.subr.mxu0 0.0
    %1980 = vmatpush1.msra.mxu0 0.0
    %1981 = vmatprep.subr.mxu0 0.0
    %1982 = vmatpush1.msra.mxu0 0.0
    %1983 = vmatprep.subr.mxu0 0.0
    %1984 = vmatpush1.msra.mxu0 0.0
    %1985 = vmatprep.subr.mxu0 0.0
    %1986 = vmatpush1.msra.mxu0 0.0
    %1987 = vmatprep.subr.mxu0 0.0
    %1988 = vmatpush1.msra.mxu0 0.0
    %1989 = vmatprep.subr.mxu0 0.0
    %1990 = vmatpush1.msra.mxu0 0.0
    %1991 = vmatprep.subr.mxu0 0.0
    %1992 = vmatpush1.msra.mxu0 0.0
    %1993 = vmatprep.subr.mxu0 0.0
    %1994 = vmatpush1.msra.mxu0 0.0
    %1995 = vmatprep.subr.mxu0 0.0
    %1996 = vmatpush1.msra.mxu0 0.0
    %1997 = vmatprep.subr.mxu0 0.0
    %1998 = vmatpush1.msra.mxu0 0.0
    %1999 = vmatprep.subr.mxu0 0.0
    %2000 = vmatpush1.msra.mxu0 0.0
    %2001 = vmatprep.subr.mxu0 0.0
    %2002 = vmatpush1.msra.mxu0 0.0
    %2003 = vmatprep.subr.mxu0 0.0
    %2004 = vmatpush1.msra.mxu0 0.0
    %2005 = vmatprep.subr.mxu0 0.0
    %2006 = vmatpush1.msra.mxu0 0.0
    %2007 = vmatprep.subr.mxu0 0.0
    %2008 = vmatpush1.msra.mxu0 0.0
    %2009 = vmatprep.subr.mxu0 0.0
    %2010 = vmatpush1.msra.mxu0 0.0
    %2011 = vmatprep.subr.mxu0 0.0
    %2012 = vmatpush1.msra.mxu0 0.0
    %2013 = vmatprep.subr.mxu0 0.0
    %2014 = vmatpush1.msra.mxu0 0.0
    %2015 = vmatprep.subr.mxu0 0.0
    %2016 = vmatpush1.msra.mxu0 0.0
    %2017 = vmatprep.subr.mxu0 0.0
    %2018 = vmatpush1.msra.mxu0 0.0
    %2019 = vmatprep.subr.mxu0 0.0
    %2020 = vmatpush1.msra.mxu0 0.0
    %2021 = vmatprep.subr.mxu0 0.0
    %2022 = vmatpush1.msra.mxu0 0.0
    %2023 = vmatprep.mubr.f32.mxu0 0.0
    %2024 = vmatmul.mubr.f32.gmra.mrb[0].mxu0 %v1878
    %v2025 = vpop.f32.mrb[0].mxu0
    %v2026 = vadd.f32 0.0, %v2025
    %v2027 = vpop.f32.mrb[0].mxu0
    %2028 = vdwg.mxu0
    %v2030 = vsel %vm175, %v1958, 0
    %2032 = vmatprep.subr.mxu0 0.0
    %2033 = vmatpush1.msra.mxu0 %v147
    %2034 = vmatprep.subr.mxu0 0.0
    %2035 = vmatpush1.msra.mxu0 %v152
    %2036 = vmatprep.subr.mxu0 0.0
    %2037 = vmatpush1.msra.mxu0 %v157
    %2038 = vmatprep.subr.mxu0 0.0
    %2039 = vmatpush1.msra.mxu0 %v162
    %2040 = vmatprep.subr.mxu0 0.0
    %2041 = vmatpush1.msra.mxu0 0.0
    %2042 = vmatprep.subr.mxu0 0.0
    %2043 = vmatpush1.msra.mxu0 0.0
    %2044 = vmatprep.subr.mxu0 0.0
    %2045 = vmatpush1.msra.mxu0 0.0
    %2046 = vmatprep.subr.mxu0 0.0
    %2047 = vmatpush1.msra.mxu0 0.0
    %2048 = vmatprep.subr.mxu0 0.0
    %2049 = vmatpush1.msra.mxu0 0.0
    %2050 = vmatprep.subr.mxu0 0.0
    %2051 = vmatpush1.msra.mxu0 0.0
    %2052 = vmatprep.subr.mxu0 0.0
    %2053 = vmatpush1.msra.mxu0 0.0
    %2054 = vmatprep.subr.mxu0 0.0
    %2055 = vmatpush1.msra.mxu0 0.0
    %2056 = vmatprep.subr.mxu0 0.0
    %2057 = vmatpush1.msra.mxu0 0.0
    %2058 = vmatprep.subr.mxu0 0.0
    %2059 = vmatpush1.msra.mxu0 0.0
    %2060 = vmatprep.subr.mxu0 0.0
    %2061 = vmatpush1.msra.mxu0 0.0
    %2062 = vmatprep.subr.mxu0 0.0
    %2063 = vmatpush1.msra.mxu0 0.0
    %2064 = vmatprep.subr.mxu0 0.0
    %2065 = vmatpush1.msra.mxu0 0.0
    %2066 = vmatprep.subr.mxu0 0.0
    %2067 = vmatpush1.msra.mxu0 0.0
    %2068 = vmatprep.subr.mxu0 0.0
    %2069 = vmatpush1.msra.mxu0 0.0
    %2070 = vmatprep.subr.mxu0 0.0
    %2071 = vmatpush1.msra.mxu0 0.0
    %2072 = vmatprep.subr.mxu0 0.0
    %2073 = vmatpush1.msra.mxu0 0.0
    %2074 = vmatprep.subr.mxu0 0.0
    %2075 = vmatpush1.msra.mxu0 0.0
    %2076 = vmatprep.subr.mxu0 0.0
    %2077 = vmatpush1.msra.mxu0 0.0
    %2078 = vmatprep.subr.mxu0 0.0
    %2079 = vmatpush1.msra.mxu0 0.0
    %2080 = vmatprep.subr.mxu0 0.0
    %2081 = vmatpush1.msra.mxu0 0.0
    %2082 = vmatprep.subr.mxu0 0.0
    %2083 = vmatpush1.msra.mxu0 0.0
    %2084 = vmatprep.subr.mxu0 0.0
    %2085 = vmatpush1.msra.mxu0 0.0
    %2086 = vmatprep.subr.mxu0 0.0
    %2087 = vmatpush1.msra.mxu0 0.0
    %2088 = vmatprep.subr.mxu0 0.0
    %2089 = vmatpush1.msra.mxu0 0.0
    %2090 = vmatprep.subr.mxu0 0.0
    %2091 = vmatpush1.msra.mxu0 0.0
    %2092 = vmatprep.subr.mxu0 0.0
    %2093 = vmatpush1.msra.mxu0 0.0
    %2094 = vmatprep.subr.mxu0 0.0
    %2095 = vmatpush1.msra.mxu0 0.0
    %2096 = vmatprep.mubr.f32.mxu0 0.0
    %2097 = vmatmul.mubr.f32.gmra.mrb[0].mxu0 %v2030
    %v2098 = vpop.f32.mrb[0].mxu0
    %v2099 = vadd.f32 %v2026, %v2098
    %v2100 = vpop.f32.mrb[0].mxu0
    %2101 = vdwg.mxu0
    %v2102 = vadd.f32 %v2099, %v326
    %v2103 = vxor.u32 %v2102, 2147483648
    %v2104 = vmul.f32 %v2103, 1.442695
    %v2105 = vpow.pop %v2104
    %v2106 = vadd.f32 %v2105, 1.0
    %v2107 = vrcp.pop %v2106
    %v2108 = vmul.f32 1.0, %v2107
    %v2109 = vtanh.pop %v2102
    %v2110 = vmul.f32 %v2108, %v1868
    %2112 = vrot.lane.b32.xlu0 %v2109, 64
    %v2113 = vpop.permute.xlu0 %2112
    %v2115 = vmul.f32 %v2108, %v2113
    %2117 = vrot.lane.b32.xlu0 %v2115, 32
    %v2118 = vpop.permute.xlu0 %2117
    %v2120 = vadd.f32 %v2110, %v2118
    %v2121 = vtanh.pop %v2120
    %2123 = vrot.lane.b32.xlu0 %v2121, 64
    %v2124 = vpop.permute.xlu0 %2123
    %v2126 = vmul.f32 %v2108, %v2124
    %2128 = vrot.lane.b32.xlu0 %v2126, 32
    %v2129 = vpop.permute.xlu0 %2128
    %v2130 = vsel %vm175, %v2129, 0
    %2132 = vmatprep.subr.mxu0 0.0
    %2133 = vmatpush1.msra.mxu0 %v62
    %2134 = vmatprep.subr.mxu0 0.0
    %2135 = vmatpush1.msra.mxu0 %v63
    %2136 = vmatprep.subr.mxu0 0.0
    %2137 = vmatpush1.msra.mxu0 %v64
    %2138 = vmatprep.subr.mxu0 0.0
    %2139 = vmatpush1.msra.mxu0 %v65
    %2140 = vmatprep.subr.mxu0 0.0
    %2141 = vmatpush1.msra.mxu0 0.0
    %2142 = vmatprep.subr.mxu0 0.0
    %2143 = vmatpush1.msra.mxu0 0.0
    %2144 = vmatprep.subr.mxu0 0.0
    %2145 = vmatpush1.msra.mxu0 0.0
    %2146 = vmatprep.subr.mxu0 0.0
    %2147 = vmatpush1.msra.mxu0 0.0
    %2148 = vmatprep.subr.mxu0 0.0
    %2149 = vmatpush1.msra.mxu0 0.0
    %2150 = vmatprep.subr.mxu0 0.0
    %2151 = vmatpush1.msra.mxu0 0.0
    %2152 = vmatprep.subr.mxu0 0.0
    %2153 = vmatpush1.msra.mxu0 0.0
    %2154 = vmatprep.subr.mxu0 0.0
    %2155 = vmatpush1.msra.mxu0 0.0
    %2156 = vmatprep.subr.mxu0 0.0
    %2157 = vmatpush1.msra.mxu0 0.0
    %2158 = vmatprep.subr.mxu0 0.0
    %2159 = vmatpush1.msra.mxu0 0.0
    %2160 = vmatprep.subr.mxu0 0.0
    %2161 = vmatpush1.msra.mxu0 0.0
    %2162 = vmatprep.subr.mxu0 0.0
    %2163 = vmatpush1.msra.mxu0 0.0
    %2164 = vmatprep.subr.mxu0 0.0
    %2165 = vmatpush1.msra.mxu0 0.0
    %2166 = vmatprep.subr.mxu0 0.0
    %2167 = vmatpush1.msra.mxu0 0.0
    %2168 = vmatprep.subr.mxu0 0.0
    %2169 = vmatpush1.msra.mxu0 0.0
    %2170 = vmatprep.subr.mxu0 0.0
    %2171 = vmatpush1.msra.mxu0 0.0
    %2172 = vmatprep.subr.mxu0 0.0
    %2173 = vmatpush1.msra.mxu0 0.0
    %2174 = vmatprep.subr.mxu0 0.0
    %2175 = vmatpush1.msra.mxu0 0.0
    %2176 = vmatprep.subr.mxu0 0.0
    %2177 = vmatpush1.msra.mxu0 0.0
    %2178 = vmatprep.subr.mxu0 0.0
    %2179 = vmatpush1.msra.mxu0 0.0
    %2180 = vmatprep.subr.mxu0 0.0
    %2181 = vmatpush1.msra.mxu0 0.0
    %2182 = vmatprep.subr.mxu0 0.0
    %2183 = vmatpush1.msra.mxu0 0.0
    %2184 = vmatprep.subr.mxu0 0.0
    %2185 = vmatpush1.msra.mxu0 0.0
    %2186 = vmatprep.subr.mxu0 0.0
    %2187 = vmatpush1.msra.mxu0 0.0
    %2188 = vmatprep.subr.mxu0 0.0
    %2189 = vmatpush1.msra.mxu0 0.0
    %2190 = vmatprep.subr.mxu0 0.0
    %2191 = vmatpush1.msra.mxu0 0.0
    %2192 = vmatprep.subr.mxu0 0.0
    %2193 = vmatpush1.msra.mxu0 0.0
    %2194 = vmatprep.subr.mxu0 0.0
    %2195 = vmatpush1.msra.mxu0 0.0
    %2196 = vmatprep.mubr.f32.mxu0 0.0
    %2197 = vmatmul.mubr.f32.gmra.mrb[0].mxu0 %v2130
    %v2198 = vpop.f32.mrb[0].mxu0
    %v2199 = vadd.f32 %v361, %v2198
    %v2200 = vpop.f32.mrb[0].mxu0
    %2201 = vdwg.mxu0
    %s2202 = scalar_lea.vmem [#allocation5], 14
    %2203 = vst.msk [vmem:[%s2202] sm:$0x3] %vm438, %v2199
    %2205 = vst.msk [vmem:[#allocation6] sm:$0x3] %vm438, %v2129
    %2207 = vrot.lane.b32.xlu0 %v2120, 96
    %v2208 = vpop.permute.xlu0 %2207
    %2210 = vst.msk [vmem:[#allocation8] sm:$0x3] %vm438, %v2208
    // Predicated region
    $region42: #{tpu_custom_call.1} parent=1 // pred_check
      _
    $region43: #{tpu_custom_call.1} parent=1 // pred_check_branch
      %2212 = sbr.rel (0) target = $region45
    $region44: #{tpu_custom_call.1} parent=1 // pred_region
      %s2214 = ssub.s32 256, 256
      %2215 = vsyncadd [#allocation4], %s2214
      %s2216 = sshll.u32 [#allocation5], 4
      %s2217 = int_to_ptr.vmem [resolvable:$true] %s2216
      %2222 = dma.vmem_to_hbm [thread:$0]  %s2217, 256, %s9, [#allocation4], 32, 32, 2
    $region45: #{tpu_custom_call.1} parent=1 // pred_fallthru
      _
    // Predicated region
    $region46: #{tpu_custom_call.1} parent=1 // pred_check
      _
    $region47: #{tpu_custom_call.1} parent=1 // pred_check_branch
      %2224 = sbr.rel (0) target = $region49
    $region48: #{tpu_custom_call.1} parent=1 // pred_region
      %s2226 = ssub.s32 32, 32
      %2227 = vsyncadd [#allocation7], %s2226
      %s2229 = sshll.u32 [#allocation6], 4
      %s2230 = int_to_ptr.vmem [resolvable:$true] %s2229
      %2232 = dma.vmem_to_hbm [thread:$0]  %s2230, 32, %s10, [#allocation7]
    $region49: #{tpu_custom_call.1} parent=1 // pred_fallthru
      _
    // Predicated region
    $region50: #{tpu_custom_call.1} parent=1 // pred_check
      _
    $region51: #{tpu_custom_call.1} parent=1 // pred_check_branch
      %2234 = sbr.rel (0) target = $region53
    $region52: #{tpu_custom_call.1} parent=1 // pred_region
      %s2236 = ssub.s32 32, 32
      %2237 = vsyncadd [#allocation7], %s2236
      %s2239 = sshll.u32 [#allocation8], 4
      %s2240 = int_to_ptr.vmem [resolvable:$true] %s2239
      %2242 = dma.vmem_to_hbm [thread:$0]  %s2240, 32, %s11, [#allocation7]
    $region53: #{tpu_custom_call.1} parent=1 // pred_fallthru
      _
    // Predicated region
    $region54: #{tpu_custom_call.1} parent=1 // pred_check
      _
    $region55: #{tpu_custom_call.1} parent=1 // pred_check_branch
      %2244 = sbr.rel (0) target = $region57
    $region56: #{tpu_custom_call.1} parent=1 // pred_region
      %2245 = dma.done [#allocation4], 256
    $region57: #{tpu_custom_call.1} parent=1 // pred_fallthru
      _
    // Predicated region
    $region58: #{tpu_custom_call.1} parent=1 // pred_check
      _
    $region59: #{tpu_custom_call.1} parent=1 // pred_check_branch
      %2247 = sbr.rel (0) target = $region61
    $region60: #{tpu_custom_call.1} parent=1 // pred_region
      %2248 = dma.done [#allocation7], 32
    $region61: #{tpu_custom_call.1} parent=1 // pred_fallthru
      _
    // Predicated region
    $region62: #{tpu_custom_call.1} parent=1 // pred_check
      _
    $region63: #{tpu_custom_call.1} parent=1 // pred_check_branch
      %2250 = sbr.rel (0) target = $region65
    $region64: #{tpu_custom_call.1} parent=1 // pred_region
      %2251 = dma.done [#allocation7], 32
    $region65: #{tpu_custom_call.1} parent=1 // pred_fallthru
      _
    %2252 = vsyncpa [#allocation3], 1
    %2253 = vsyncpa [#allocation4], 1
    %2254 = vsyncpa [#allocation7], 1

</llo_original>
